<compile_context>
chip_gen: v5e
topology: v5e:2x2
jax: 0.10.0
libtpu: 0.0.40
codegen_flags: <defaults>
</compile_context>

<pallas_src>
import math

import jax
import jax.numpy as jnp
from jax.experimental import pallas as pl
from jax.experimental.pallas import tpu as pltpu

# Operand dtype for every MXU matmul. Flip to jnp.bfloat16 on v6e / v7x
# (bf16-native MXU, halved HBM->VMEM bytes); accumulation stays f32 via
# preferred_element_type. f32 default exactly matches the PyTorch reference.
_MATMUL_DTYPE = jnp.float32


# ============================ Pallas kernel ==============================

def _make_attention_kernel(num_heads: int, head_dim: int):
    """Builds the fused attention kernel (one batch element per grid step)."""

    def kernel(q_ref, k_ref, v_ref, wqkv_ref, bqkv_ref, wo_ref, bo_ref,
               o_ref, oacc_ref):
        # q_ref   : (1, Nq, D)          k_ref / v_ref : (1, Nk, D)
        # wqkv_ref: (3, D, I)  pre-transposed q/k/v weights (scale folded in [0])
        # bqkv_ref: (3, 1, I)  lane-dense biases           (scale folded in [0])
        # wo_ref  : (I, D)     pre-transposed out-proj weight
        # bo_ref  : (1, D)
        # o_ref   : (1, Nq, D)
        # oacc_ref: (Nq, I) f32 VMEM scratch (lane-concatenated head outputs)
        q2 = q_ref[0]                      # (Nq, D)  _MATMUL_DTYPE
        k2 = k_ref[0]                      # (Nk, D)
        v2 = v_ref[0]                      # (Nk, D)

        # Lane-dense projections: one (N, D) @ (D, I) matmul each.
        qp = jnp.dot(q2, wqkv_ref[0], preferred_element_type=jnp.float32) + bqkv_ref[0]
        kp = jnp.dot(k2, wqkv_ref[1], preferred_element_type=jnp.float32) + bqkv_ref[1]
        vp = jnp.dot(v2, wqkv_ref[2], preferred_element_type=jnp.float32) + bqkv_ref[2]

        # Per-head softmax attention; heads = static lane slices of the
        # projection outputs (no broadcast / transpose of activations).
        for h in range(num_heads):
            sl = slice(h * head_dim, (h + 1) * head_dim)
            qh = qp[:, sl].astype(_MATMUL_DTYPE)         # (Nq, hd)
            kh = kp[:, sl].astype(_MATMUL_DTYPE)         # (Nk, hd)
            vh = vp[:, sl].astype(_MATMUL_DTYPE)         # (Nk, hd)

            s = jnp.einsum('qe,ke->qk', qh, kh,
                           preferred_element_type=jnp.float32)      # (Nq, Nk)
            s = s - jnp.max(s, axis=-1, keepdims=True)
            p = jnp.exp(s)
            inv = pl.reciprocal(jnp.sum(p, axis=-1, keepdims=True), approx=False)
            p = p * inv

            oh = jnp.dot(p.astype(_MATMUL_DTYPE), vh,
                         preferred_element_type=jnp.float32)         # (Nq, hd)
            # Head recombination = lane-offset write into the (Nq, I) scratch.
            oacc_ref[:, sl] = oh

        # Single well-shaped out-projection: (Nq, I) @ (I, D).
        out = jnp.dot(oacc_ref[...].astype(_MATMUL_DTYPE), wo_ref[...],
                      preferred_element_type=jnp.float32) + bo_ref[...]
        o_ref[0] = out.astype(o_ref.dtype)

    return kernel


# ============================ host wrapper ===============================

def sam_attention(q, k, v, params, num_heads):
    """Pallas implementation of Attention.forward(q, k, v).

    params use PyTorch nn.Linear layout:
      wq, wk, wv: (internal_dim, embedding_dim), bq, bk, bv: (internal_dim,)
      wo: (embedding_dim, internal_dim),         bo: (embedding_dim,)
    """
    f32 = jnp.float32
    batch, nq, d = q.shape
    nk = k.shape[1]
    internal_dim = params['wq'].shape[0]
    assert internal_dim % num_heads == 0
    hd = internal_dim // num_heads
    scale = 1.0 / math.sqrt(hd)

    # ---- trace-time weight re-layout: pre-transpose, pack, fold the scale ----
    # PyTorch nn.Linear: y = x @ W.T + b with W: (out, in).
    wq_t = params['wq'].astype(f32).T * scale                        # (D, I)
    wk_t = params['wk'].astype(f32).T
    wv_t = params['wv'].astype(f32).T
    w_qkv = jnp.stack([wq_t, wk_t, wv_t], axis=0).astype(_MATMUL_DTYPE)  # (3, D, I)

    b_qkv = jnp.stack([params['bq'].astype(f32) * scale,
                       params['bk'].astype(f32),
                       params['bv'].astype(f32)],
                      axis=0).reshape(3, 1, internal_dim)            # (3, 1, I) f32

    w_o = params['wo'].astype(f32).T.astype(_MATMUL_DTYPE)           # (I, D)
    b_o = params['bo'].astype(f32).reshape(1, d)                     # (1, D)

    kernel = _make_attention_kernel(num_heads, hd)

    def resident(*shape):      # weights: constant block index -> stay in VMEM
        return pl.BlockSpec(shape, lambda b, _n=len(shape): (0,) * _n)

    return pl.pallas_call(
        kernel,
        out_shape=jax.ShapeDtypeStruct((batch, nq, d), f32),
        grid=(batch,),
        in_specs=[
            pl.BlockSpec((1, nq, d), lambda b: (b, 0, 0)),
            pl.BlockSpec((1, nk, d), lambda b: (b, 0, 0)),
            pl.BlockSpec((1, nk, d), lambda b: (b, 0, 0)),
            resident(3, d, internal_dim),
            resident(3, 1, internal_dim),
            resident(internal_dim, d),
            resident(1, d),
        ],
        out_specs=pl.BlockSpec((1, nq, d), lambda b: (b, 0, 0)),
        scratch_shapes=[pltpu.VMEM((nq, internal_dim), jnp.float32)],
        compiler_params=pltpu.CompilerParams(
            dimension_semantics=("parallel",),
            vmem_limit_bytes=32 * 1024 * 1024),
    )(q.astype(_MATMUL_DTYPE), k.astype(_MATMUL_DTYPE), v.astype(_MATMUL_DTYPE),
      w_qkv, b_qkv, w_o, b_o)


# ====================== pure-JAX reference (PyTorch) =====================

def attention_reference(q, k, v, params, num_heads):
    def lin(x, w, b):
        return jnp.einsum('bnd,od->bno', x, w) + b

    qp = lin(q, params['wq'], params['bq'])
    kp = lin(k, params['wk'], params['bk'])
    vp = lin(v, params['wv'], params['bv'])
    b, nq, di = qp.shape
    hd = di // num_heads

    def split(x):
        bb, n, c = x.shape
        return x.reshape(bb, n, num_heads, c // num_heads).transpose(0, 2, 1, 3)

    qh, kh, vh = split(qp), split(kp), split(vp)
    attn = jnp.einsum('bhqd,bhkd->bhqk', qh, kh) / math.sqrt(hd)
    attn = jax.nn.softmax(attn, axis=-1)
    out = jnp.einsum('bhqk,bhkd->bhqd', attn, vh)
    out = out.transpose(0, 2, 1, 3).reshape(b, nq, di)
    return jnp.einsum('bnd,od->bno', out, params['wo']) + params['bo']


# ================================ main ===================================

def init_attention_params(key, embedding_dim, internal_dim):
    ks = jax.random.split(key, 8)
    s_in = 1.0 / math.sqrt(embedding_dim)
    s_int = 1.0 / math.sqrt(internal_dim)

    def u(kk, shape, s):
        return jax.random.uniform(kk, shape, jnp.float32, -s, s)

    return {
        'wq': u(ks[0], (internal_dim, embedding_dim), s_in),
        'bq': u(ks[1], (internal_dim,), s_in),
        'wk': u(ks[2], (internal_dim, embedding_dim), s_in),
        'bk': u(ks[3], (internal_dim,), s_in),
        'wv': u(ks[4], (internal_dim, embedding_dim), s_in),
        'bv': u(ks[5], (internal_dim,), s_in),
        'wo': u(ks[6], (embedding_dim, internal_dim), s_int),
        'bo': u(ks[7], (embedding_dim,), s_int),
    }


if __name__ == "__main__":
    EMBED_DIM = 64
    NUM_HEADS = 8
    DOWNSAMPLE_RATE = 1
    INTERNAL_DIM = EMBED_DIM // DOWNSAMPLE_RATE
    B, NQ, NK = 2, 8, 16

    root = jax.random.PRNGKey(0)
    kp, kq, kk, kv = jax.random.split(root, 4)
    params = init_attention_params(kp, EMBED_DIM, INTERNAL_DIM)
    q = jax.random.normal(kq, (B, NQ, EMBED_DIM), jnp.float32)
    k = jax.random.normal(kk, (B, NK, EMBED_DIM), jnp.float32)
    v = jax.random.normal(kv, (B, NK, EMBED_DIM), jnp.float32)

    fwd = jax.jit(lambda q_, k_, v_, p_: sam_attention(q_, k_, v_, p_, NUM_HEADS))
    out = fwd(q, k, v, params)
    jax.block_until_ready(out)

    ref = attention_reference(q, k, v, params, NUM_HEADS)
    err = float(jnp.max(jnp.abs(out - ref)))
    tol = 1e-3 if _MATMUL_DTYPE == jnp.float32 else 2e-2   # loosen for bf16 operands
    assert err < tol, f"kernel/reference mismatch: max abs err = {err}"
    print("KERNEL_OK")
</pallas_src>

<mosaic_0001>
module attributes {stable_mosaic.version = 11 : i64} {
  func.func @kernel(%arg0: i32, %arg1: memref<1x8x64xf32, #tpu.memory_space<vmem>>, %arg2: memref<1x16x64xf32, #tpu.memory_space<vmem>>, %arg3: memref<1x16x64xf32, #tpu.memory_space<vmem>>, %arg4: memref<3x64x64xf32, #tpu.memory_space<vmem>>, %arg5: memref<3x1x64xf32, #tpu.memory_space<vmem>>, %arg6: memref<64x64xf32, #tpu.memory_space<vmem>>, %arg7: memref<1x64xf32, #tpu.memory_space<vmem>>, %arg8: memref<1x8x64xf32, #tpu.memory_space<vmem>>, %arg9: memref<8x64xf32, #tpu.memory_space<vmem>>) attributes {dimension_semantics = [#tpu.dimension_semantics<parallel>], iteration_bounds = array<i64: 2>, scalar_prefetch = 0 : i64, scratch_operands = 1 : i64, tpu.core_type = #tpu.core_type<tc>, window_params = [{transform_indices = @transform_0, window_bounds = array<i64: 1, 8, 64>}, {transform_indices = @transform_1, window_bounds = array<i64: 1, 16, 64>}, {transform_indices = @transform_2, window_bounds = array<i64: 1, 16, 64>}, {pipeline_mode = #tpu.pipeline_mode<synchronous>, transform_indices = @transform_3, window_bounds = array<i64: 3, 64, 64>}, {pipeline_mode = #tpu.pipeline_mode<synchronous>, transform_indices = @transform_4, window_bounds = array<i64: 3, 1, 64>}, {pipeline_mode = #tpu.pipeline_mode<synchronous>, transform_indices = @transform_5, window_bounds = array<i64: 64, 64>}, {pipeline_mode = #tpu.pipeline_mode<synchronous>, transform_indices = @transform_6, window_bounds = array<i64: 1, 64>}, {transform_indices = @transform_7, window_bounds = array<i64: 1, 8, 64>}]} {
    %c0 = arith.constant 0 : index
    %c0_0 = arith.constant 0 : index
    %c0_1 = arith.constant 0 : index
    %0 = vector.load %arg1[%c0, %c0_0, %c0_1] : memref<1x8x64xf32, #tpu.memory_space<vmem>>, vector<1x8x64xf32>
    %1 = vector.shape_cast %0 : vector<1x8x64xf32> to vector<8x64xf32>
    %c0_2 = arith.constant 0 : index
    %c0_3 = arith.constant 0 : index
    %c0_4 = arith.constant 0 : index
    %2 = vector.load %arg2[%c0_2, %c0_3, %c0_4] : memref<1x16x64xf32, #tpu.memory_space<vmem>>, vector<1x16x64xf32>
    %3 = vector.shape_cast %2 : vector<1x16x64xf32> to vector<16x64xf32>
    %c0_5 = arith.constant 0 : index
    %c0_6 = arith.constant 0 : index
    %c0_7 = arith.constant 0 : index
    %4 = vector.load %arg3[%c0_5, %c0_6, %c0_7] : memref<1x16x64xf32, #tpu.memory_space<vmem>>, vector<1x16x64xf32>
    %5 = vector.shape_cast %4 : vector<1x16x64xf32> to vector<16x64xf32>
    %c0_8 = arith.constant 0 : index
    %c0_9 = arith.constant 0 : index
    %c0_10 = arith.constant 0 : index
    %6 = vector.load %arg4[%c0_8, %c0_9, %c0_10] : memref<3x64x64xf32, #tpu.memory_space<vmem>>, vector<1x64x64xf32>
    %7 = vector.shape_cast %6 : vector<1x64x64xf32> to vector<64x64xf32>
    %cst = arith.constant dense<0.000000e+00> : vector<8x64xf32>
    %8 = tpu.matmul %1, %7, %cst {dimension_numbers = #tpu.dot_dimension_numbers<[1], [0], [0], [1], [0, 0, 1, 1], [], []>} : vector<8x64xf32>, vector<64x64xf32>, vector<8x64xf32> -> vector<8x64xf32>
    %c0_11 = arith.constant 0 : index
    %c0_12 = arith.constant 0 : index
    %c0_13 = arith.constant 0 : index
    %9 = vector.load %arg5[%c0_11, %c0_12, %c0_13] : memref<3x1x64xf32, #tpu.memory_space<vmem>>, vector<1x1x64xf32>
    %10 = vector.shape_cast %9 : vector<1x1x64xf32> to vector<1x64xf32>
    %11 = vector.broadcast %10 : vector<1x64xf32> to vector<8x64xf32>
    %12 = arith.addf %8, %11 : vector<8x64xf32>
    %c1 = arith.constant 1 : index
    %c0_14 = arith.constant 0 : index
    %c0_15 = arith.constant 0 : index
    %13 = vector.load %arg4[%c1, %c0_14, %c0_15] : memref<3x64x64xf32, #tpu.memory_space<vmem>>, vector<1x64x64xf32>
    %14 = vector.shape_cast %13 : vector<1x64x64xf32> to vector<64x64xf32>
    %cst_16 = arith.constant dense<0.000000e+00> : vector<16x64xf32>
    %15 = tpu.matmul %3, %14, %cst_16 {dimension_numbers = #tpu.dot_dimension_numbers<[1], [0], [0], [1], [0, 0, 1, 1], [], []>} : vector<16x64xf32>, vector<64x64xf32>, vector<16x64xf32> -> vector<16x64xf32>
    %c1_17 = arith.constant 1 : index
    %c0_18 = arith.constant 0 : index
    %c0_19 = arith.constant 0 : index
    %16 = vector.load %arg5[%c1_17, %c0_18, %c0_19] : memref<3x1x64xf32, #tpu.memory_space<vmem>>, vector<1x1x64xf32>
    %17 = vector.shape_cast %16 : vector<1x1x64xf32> to vector<1x64xf32>
    %18 = vector.broadcast %17 : vector<1x64xf32> to vector<16x64xf32>
    %19 = arith.addf %15, %18 : vector<16x64xf32>
    %c2 = arith.constant 2 : index
    %c0_20 = arith.constant 0 : index
    %c0_21 = arith.constant 0 : index
    %20 = vector.load %arg4[%c2, %c0_20, %c0_21] : memref<3x64x64xf32, #tpu.memory_space<vmem>>, vector<1x64x64xf32>
    %21 = vector.shape_cast %20 : vector<1x64x64xf32> to vector<64x64xf32>
    %cst_22 = arith.constant dense<0.000000e+00> : vector<16x64xf32>
    %22 = tpu.matmul %5, %21, %cst_22 {dimension_numbers = #tpu.dot_dimension_numbers<[1], [0], [0], [1], [0, 0, 1, 1], [], []>} : vector<16x64xf32>, vector<64x64xf32>, vector<16x64xf32> -> vector<16x64xf32>
    %c2_23 = arith.constant 2 : index
    %c0_24 = arith.constant 0 : index
    %c0_25 = arith.constant 0 : index
    %23 = vector.load %arg5[%c2_23, %c0_24, %c0_25] : memref<3x1x64xf32, #tpu.memory_space<vmem>>, vector<1x1x64xf32>
    %24 = vector.shape_cast %23 : vector<1x1x64xf32> to vector<1x64xf32>
    %25 = vector.broadcast %24 : vector<1x64xf32> to vector<16x64xf32>
    %26 = arith.addf %22, %25 : vector<16x64xf32>
    %27 = vector.extract_strided_slice %12 {offsets = [0, 0], sizes = [8, 8], strides = [1, 1]} : vector<8x64xf32> to vector<8x8xf32>
    %28 = vector.extract_strided_slice %19 {offsets = [0, 0], sizes = [16, 8], strides = [1, 1]} : vector<16x64xf32> to vector<16x8xf32>
    %29 = vector.extract_strided_slice %26 {offsets = [0, 0], sizes = [16, 8], strides = [1, 1]} : vector<16x64xf32> to vector<16x8xf32>
    "tpu.trace_start"() <{level = 10 : i32, message = "qe,ke->qk"}> : () -> ()
    %cst_26 = arith.constant dense<0.000000e+00> : vector<8x16xf32>
    %30 = tpu.matmul %27, %28, %cst_26 {dimension_numbers = #tpu.dot_dimension_numbers<[1], [1], [0], [0], [0, 0, 1, 0], [], []>} : vector<8x8xf32>, vector<16x8xf32>, vector<8x16xf32> -> vector<8x16xf32>
    "tpu.trace_stop"() : () -> ()
    %cst_27 = arith.constant dense<0xFF800000> : vector<8xf32>
    %31 = vector.multi_reduction <maximumf>, %30, %cst_27 [1] : vector<8x16xf32> to vector<8xf32>
    %32 = vector.shape_cast %31 : vector<8xf32> to vector<8x1xf32>
    %33 = vector.broadcast %32 : vector<8x1xf32> to vector<8x16xf32>
    %34 = arith.subf %30, %33 : vector<8x16xf32>
    %35 = math.exp %34 : vector<8x16xf32>
    %cst_28 = arith.constant dense<0.000000e+00> : vector<8xf32>
    %36 = vector.multi_reduction <add>, %35, %cst_28 [1] : vector<8x16xf32> to vector<8xf32>
    %37 = vector.shape_cast %36 : vector<8xf32> to vector<8x1xf32>
    %38 = tpu.reciprocal %37 : vector<8x1xf32> -> vector<8x1xf32>
    %39 = vector.broadcast %38 : vector<8x1xf32> to vector<8x16xf32>
    %40 = arith.mulf %35, %39 : vector<8x16xf32>
    %cst_29 = arith.constant dense<0.000000e+00> : vector<8x8xf32>
    %41 = tpu.matmul %40, %29, %cst_29 {dimension_numbers = #tpu.dot_dimension_numbers<[1], [0], [0], [1], [0, 0, 1, 1], [], []>} : vector<8x16xf32>, vector<16x8xf32>, vector<8x8xf32> -> vector<8x8xf32>
    %c0_30 = arith.constant 0 : index
    %c0_31 = arith.constant 0 : index
    %42 = vector.load %arg9[%c0_30, %c0_31] : memref<8x64xf32, #tpu.memory_space<vmem>>, vector<8x8xf32>
    tpu.vector_store %arg9[%c0_30, %c0_31], %41 {strides = array<i32>} : memref<8x64xf32, #tpu.memory_space<vmem>>, vector<8x8xf32>,
    %43 = vector.extract_strided_slice %12 {offsets = [0, 8], sizes = [8, 8], strides = [1, 1]} : vector<8x64xf32> to vector<8x8xf32>
    %44 = vector.extract_strided_slice %19 {offsets = [0, 8], sizes = [16, 8], strides = [1, 1]} : vector<16x64xf32> to vector<16x8xf32>
    %45 = vector.extract_strided_slice %26 {offsets = [0, 8], sizes = [16, 8], strides = [1, 1]} : vector<16x64xf32> to vector<16x8xf32>
    "tpu.trace_start"() <{level = 10 : i32, message = "qe,ke->qk"}> : () -> ()
    %cst_32 = arith.constant dense<0.000000e+00> : vector<8x16xf32>
    %46 = tpu.matmul %43, %44, %cst_32 {dimension_numbers = #tpu.dot_dimension_numbers<[1], [1], [0], [0], [0, 0, 1, 0], [], []>} : vector<8x8xf32>, vector<16x8xf32>, vector<8x16xf32> -> vector<8x16xf32>
    "tpu.trace_stop"() : () -> ()
    %cst_33 = arith.constant dense<0xFF800000> : vector<8xf32>
    %47 = vector.multi_reduction <maximumf>, %46, %cst_33 [1] : vector<8x16xf32> to vector<8xf32>
    %48 = vector.shape_cast %47 : vector<8xf32> to vector<8x1xf32>
    %49 = vector.broadcast %48 : vector<8x1xf32> to vector<8x16xf32>
    %50 = arith.subf %46, %49 : vector<8x16xf32>
    %51 = math.exp %50 : vector<8x16xf32>
    %cst_34 = arith.constant dense<0.000000e+00> : vector<8xf32>
    %52 = vector.multi_reduction <add>, %51, %cst_34 [1] : vector<8x16xf32> to vector<8xf32>
    %53 = vector.shape_cast %52 : vector<8xf32> to vector<8x1xf32>
    %54 = tpu.reciprocal %53 : vector<8x1xf32> -> vector<8x1xf32>
    %55 = vector.broadcast %54 : vector<8x1xf32> to vector<8x16xf32>
    %56 = arith.mulf %51, %55 : vector<8x16xf32>
    %cst_35 = arith.constant dense<0.000000e+00> : vector<8x8xf32>
    %57 = tpu.matmul %56, %45, %cst_35 {dimension_numbers = #tpu.dot_dimension_numbers<[1], [0], [0], [1], [0, 0, 1, 1], [], []>} : vector<8x16xf32>, vector<16x8xf32>, vector<8x8xf32> -> vector<8x8xf32>
    %c0_36 = arith.constant 0 : index
    %c8 = arith.constant 8 : index
    %58 = vector.load %arg9[%c0_36, %c8] : memref<8x64xf32, #tpu.memory_space<vmem>>, vector<8x8xf32>
    tpu.vector_store %arg9[%c0_36, %c8], %57 {strides = array<i32>} : memref<8x64xf32, #tpu.memory_space<vmem>>, vector<8x8xf32>,
    %59 = vector.extract_strided_slice %12 {offsets = [0, 16], sizes = [8, 8], strides = [1, 1]} : vector<8x64xf32> to vector<8x8xf32>
    %60 = vector.extract_strided_slice %19 {offsets = [0, 16], sizes = [16, 8], strides = [1, 1]} : vector<16x64xf32> to vector<16x8xf32>
    %61 = vector.extract_strided_slice %26 {offsets = [0, 16], sizes = [16, 8], strides = [1, 1]} : vector<16x64xf32> to vector<16x8xf32>
    "tpu.trace_start"() <{level = 10 : i32, message = "qe,ke->qk"}> : () -> ()
    %cst_37 = arith.constant dense<0.000000e+00> : vector<8x16xf32>
    %62 = tpu.matmul %59, %60, %cst_37 {dimension_numbers = #tpu.dot_dimension_numbers<[1], [1], [0], [0], [0, 0, 1, 0], [], []>} : vector<8x8xf32>, vector<16x8xf32>, vector<8x16xf32> -> vector<8x16xf32>
    "tpu.trace_stop"() : () -> ()
    %cst_38 = arith.constant dense<0xFF800000> : vector<8xf32>
    %63 = vector.multi_reduction <maximumf>, %62, %cst_38 [1] : vector<8x16xf32> to vector<8xf32>
    %64 = vector.shape_cast %63 : vector<8xf32> to vector<8x1xf32>
    %65 = vector.broadcast %64 : vector<8x1xf32> to vector<8x16xf32>
    %66 = arith.subf %62, %65 : vector<8x16xf32>
    %67 = math.exp %66 : vector<8x16xf32>
    %cst_39 = arith.constant dense<0.000000e+00> : vector<8xf32>
    %68 = vector.multi_reduction <add>, %67, %cst_39 [1] : vector<8x16xf32> to vector<8xf32>
    %69 = vector.shape_cast %68 : vector<8xf32> to vector<8x1xf32>
    %70 = tpu.reciprocal %69 : vector<8x1xf32> -> vector<8x1xf32>
    %71 = vector.broadcast %70 : vector<8x1xf32> to vector<8x16xf32>
    %72 = arith.mulf %67, %71 : vector<8x16xf32>
    %cst_40 = arith.constant dense<0.000000e+00> : vector<8x8xf32>
    %73 = tpu.matmul %72, %61, %cst_40 {dimension_numbers = #tpu.dot_dimension_numbers<[1], [0], [0], [1], [0, 0, 1, 1], [], []>} : vector<8x16xf32>, vector<16x8xf32>, vector<8x8xf32> -> vector<8x8xf32>
    %c0_41 = arith.constant 0 : index
    %c16 = arith.constant 16 : index
    %74 = vector.load %arg9[%c0_41, %c16] : memref<8x64xf32, #tpu.memory_space<vmem>>, vector<8x8xf32>
    tpu.vector_store %arg9[%c0_41, %c16], %73 {strides = array<i32>} : memref<8x64xf32, #tpu.memory_space<vmem>>, vector<8x8xf32>,
    %75 = vector.extract_strided_slice %12 {offsets = [0, 24], sizes = [8, 8], strides = [1, 1]} : vector<8x64xf32> to vector<8x8xf32>
    %76 = vector.extract_strided_slice %19 {offsets = [0, 24], sizes = [16, 8], strides = [1, 1]} : vector<16x64xf32> to vector<16x8xf32>
    %77 = vector.extract_strided_slice %26 {offsets = [0, 24], sizes = [16, 8], strides = [1, 1]} : vector<16x64xf32> to vector<16x8xf32>
    "tpu.trace_start"() <{level = 10 : i32, message = "qe,ke->qk"}> : () -> ()
    %cst_42 = arith.constant dense<0.000000e+00> : vector<8x16xf32>
    %78 = tpu.matmul %75, %76, %cst_42 {dimension_numbers = #tpu.dot_dimension_numbers<[1], [1], [0], [0], [0, 0, 1, 0], [], []>} : vector<8x8xf32>, vector<16x8xf32>, vector<8x16xf32> -> vector<8x16xf32>
    "tpu.trace_stop"() : () -> ()
    %cst_43 = arith.constant dense<0xFF800000> : vector<8xf32>
    %79 = vector.multi_reduction <maximumf>, %78, %cst_43 [1] : vector<8x16xf32> to vector<8xf32>
    %80 = vector.shape_cast %79 : vector<8xf32> to vector<8x1xf32>
    %81 = vector.broadcast %80 : vector<8x1xf32> to vector<8x16xf32>
    %82 = arith.subf %78, %81 : vector<8x16xf32>
    %83 = math.exp %82 : vector<8x16xf32>
    %cst_44 = arith.constant dense<0.000000e+00> : vector<8xf32>
    %84 = vector.multi_reduction <add>, %83, %cst_44 [1] : vector<8x16xf32> to vector<8xf32>
    %85 = vector.shape_cast %84 : vector<8xf32> to vector<8x1xf32>
    %86 = tpu.reciprocal %85 : vector<8x1xf32> -> vector<8x1xf32>
    %87 = vector.broadcast %86 : vector<8x1xf32> to vector<8x16xf32>
    %88 = arith.mulf %83, %87 : vector<8x16xf32>
    %cst_45 = arith.constant dense<0.000000e+00> : vector<8x8xf32>
    %89 = tpu.matmul %88, %77, %cst_45 {dimension_numbers = #tpu.dot_dimension_numbers<[1], [0], [0], [1], [0, 0, 1, 1], [], []>} : vector<8x16xf32>, vector<16x8xf32>, vector<8x8xf32> -> vector<8x8xf32>
    %c0_46 = arith.constant 0 : index
    %c24 = arith.constant 24 : index
    %90 = vector.load %arg9[%c0_46, %c24] : memref<8x64xf32, #tpu.memory_space<vmem>>, vector<8x8xf32>
    tpu.vector_store %arg9[%c0_46, %c24], %89 {strides = array<i32>} : memref<8x64xf32, #tpu.memory_space<vmem>>, vector<8x8xf32>,
    %91 = vector.extract_strided_slice %12 {offsets = [0, 32], sizes = [8, 8], strides = [1, 1]} : vector<8x64xf32> to vector<8x8xf32>
    %92 = vector.extract_strided_slice %19 {offsets = [0, 32], sizes = [16, 8], strides = [1, 1]} : vector<16x64xf32> to vector<16x8xf32>
    %93 = vector.extract_strided_slice %26 {offsets = [0, 32], sizes = [16, 8], strides = [1, 1]} : vector<16x64xf32> to vector<16x8xf32>
    "tpu.trace_start"() <{level = 10 : i32, message = "qe,ke->qk"}> : () -> ()
    %cst_47 = arith.constant dense<0.000000e+00> : vector<8x16xf32>
    %94 = tpu.matmul %91, %92, %cst_47 {dimension_numbers = #tpu.dot_dimension_numbers<[1], [1], [0], [0], [0, 0, 1, 0], [], []>} : vector<8x8xf32>, vector<16x8xf32>, vector<8x16xf32> -> vector<8x16xf32>
    "tpu.trace_stop"() : () -> ()
    %cst_48 = arith.constant dense<0xFF800000> : vector<8xf32>
    %95 = vector.multi_reduction <maximumf>, %94, %cst_48 [1] : vector<8x16xf32> to vector<8xf32>
    %96 = vector.shape_cast %95 : vector<8xf32> to vector<8x1xf32>
    %97 = vector.broadcast %96 : vector<8x1xf32> to vector<8x16xf32>
    %98 = arith.subf %94, %97 : vector<8x16xf32>
    %99 = math.exp %98 : vector<8x16xf32>
    %cst_49 = arith.constant dense<0.000000e+00> : vector<8xf32>
    %100 = vector.multi_reduction <add>, %99, %cst_49 [1] : vector<8x16xf32> to vector<8xf32>
    %101 = vector.shape_cast %100 : vector<8xf32> to vector<8x1xf32>
    %102 = tpu.reciprocal %101 : vector<8x1xf32> -> vector<8x1xf32>
    %103 = vector.broadcast %102 : vector<8x1xf32> to vector<8x16xf32>
    %104 = arith.mulf %99, %103 : vector<8x16xf32>
    %cst_50 = arith.constant dense<0.000000e+00> : vector<8x8xf32>
    %105 = tpu.matmul %104, %93, %cst_50 {dimension_numbers = #tpu.dot_dimension_numbers<[1], [0], [0], [1], [0, 0, 1, 1], [], []>} : vector<8x16xf32>, vector<16x8xf32>, vector<8x8xf32> -> vector<8x8xf32>
    %c0_51 = arith.constant 0 : index
    %c32 = arith.constant 32 : index
    %106 = vector.load %arg9[%c0_51, %c32] : memref<8x64xf32, #tpu.memory_space<vmem>>, vector<8x8xf32>
    tpu.vector_store %arg9[%c0_51, %c32], %105 {strides = array<i32>} : memref<8x64xf32, #tpu.memory_space<vmem>>, vector<8x8xf32>,
    %107 = vector.extract_strided_slice %12 {offsets = [0, 40], sizes = [8, 8], strides = [1, 1]} : vector<8x64xf32> to vector<8x8xf32>
    %108 = vector.extract_strided_slice %19 {offsets = [0, 40], sizes = [16, 8], strides = [1, 1]} : vector<16x64xf32> to vector<16x8xf32>
    %109 = vector.extract_strided_slice %26 {offsets = [0, 40], sizes = [16, 8], strides = [1, 1]} : vector<16x64xf32> to vector<16x8xf32>
    "tpu.trace_start"() <{level = 10 : i32, message = "qe,ke->qk"}> : () -> ()
    %cst_52 = arith.constant dense<0.000000e+00> : vector<8x16xf32>
    %110 = tpu.matmul %107, %108, %cst_52 {dimension_numbers = #tpu.dot_dimension_numbers<[1], [1], [0], [0], [0, 0, 1, 0], [], []>} : vector<8x8xf32>, vector<16x8xf32>, vector<8x16xf32> -> vector<8x16xf32>
    "tpu.trace_stop"() : () -> ()
    %cst_53 = arith.constant dense<0xFF800000> : vector<8xf32>
    %111 = vector.multi_reduction <maximumf>, %110, %cst_53 [1] : vector<8x16xf32> to vector<8xf32>
    %112 = vector.shape_cast %111 : vector<8xf32> to vector<8x1xf32>
    %113 = vector.broadcast %112 : vector<8x1xf32> to vector<8x16xf32>
    %114 = arith.subf %110, %113 : vector<8x16xf32>
    %115 = math.exp %114 : vector<8x16xf32>
    %cst_54 = arith.constant dense<0.000000e+00> : vector<8xf32>
    %116 = vector.multi_reduction <add>, %115, %cst_54 [1] : vector<8x16xf32> to vector<8xf32>
    %117 = vector.shape_cast %116 : vector<8xf32> to vector<8x1xf32>
    %118 = tpu.reciprocal %117 : vector<8x1xf32> -> vector<8x1xf32>
    %119 = vector.broadcast %118 : vector<8x1xf32> to vector<8x16xf32>
    %120 = arith.mulf %115, %119 : vector<8x16xf32>
    %cst_55 = arith.constant dense<0.000000e+00> : vector<8x8xf32>
    %121 = tpu.matmul %120, %109, %cst_55 {dimension_numbers = #tpu.dot_dimension_numbers<[1], [0], [0], [1], [0, 0, 1, 1], [], []>} : vector<8x16xf32>, vector<16x8xf32>, vector<8x8xf32> -> vector<8x8xf32>
    %c0_56 = arith.constant 0 : index
    %c40 = arith.constant 40 : index
    %122 = vector.load %arg9[%c0_56, %c40] : memref<8x64xf32, #tpu.memory_space<vmem>>, vector<8x8xf32>
    tpu.vector_store %arg9[%c0_56, %c40], %121 {strides = array<i32>} : memref<8x64xf32, #tpu.memory_space<vmem>>, vector<8x8xf32>,
    %123 = vector.extract_strided_slice %12 {offsets = [0, 48], sizes = [8, 8], strides = [1, 1]} : vector<8x64xf32> to vector<8x8xf32>
    %124 = vector.extract_strided_slice %19 {offsets = [0, 48], sizes = [16, 8], strides = [1, 1]} : vector<16x64xf32> to vector<16x8xf32>
    %125 = vector.extract_strided_slice %26 {offsets = [0, 48], sizes = [16, 8], strides = [1, 1]} : vector<16x64xf32> to vector<16x8xf32>
    "tpu.trace_start"() <{level = 10 : i32, message = "qe,ke->qk"}> : () -> ()
    %cst_57 = arith.constant dense<0.000000e+00> : vector<8x16xf32>
    %126 = tpu.matmul %123, %124, %cst_57 {dimension_numbers = #tpu.dot_dimension_numbers<[1], [1], [0], [0], [0, 0, 1, 0], [], []>} : vector<8x8xf32>, vector<16x8xf32>, vector<8x16xf32> -> vector<8x16xf32>
    "tpu.trace_stop"() : () -> ()
    %cst_58 = arith.constant dense<0xFF800000> : vector<8xf32>
    %127 = vector.multi_reduction <maximumf>, %126, %cst_58 [1] : vector<8x16xf32> to vector<8xf32>
    %128 = vector.shape_cast %127 : vector<8xf32> to vector<8x1xf32>
    %129 = vector.broadcast %128 : vector<8x1xf32> to vector<8x16xf32>
    %130 = arith.subf %126, %129 : vector<8x16xf32>
    %131 = math.exp %130 : vector<8x16xf32>
    %cst_59 = arith.constant dense<0.000000e+00> : vector<8xf32>
    %132 = vector.multi_reduction <add>, %131, %cst_59 [1] : vector<8x16xf32> to vector<8xf32>
    %133 = vector.shape_cast %132 : vector<8xf32> to vector<8x1xf32>
    %134 = tpu.reciprocal %133 : vector<8x1xf32> -> vector<8x1xf32>
    %135 = vector.broadcast %134 : vector<8x1xf32> to vector<8x16xf32>
    %136 = arith.mulf %131, %135 : vector<8x16xf32>
    %cst_60 = arith.constant dense<0.000000e+00> : vector<8x8xf32>
    %137 = tpu.matmul %136, %125, %cst_60 {dimension_numbers = #tpu.dot_dimension_numbers<[1], [0], [0], [1], [0, 0, 1, 1], [], []>} : vector<8x16xf32>, vector<16x8xf32>, vector<8x8xf32> -> vector<8x8xf32>
    %c0_61 = arith.constant 0 : index
    %c48 = arith.constant 48 : index
    %138 = vector.load %arg9[%c0_61, %c48] : memref<8x64xf32, #tpu.memory_space<vmem>>, vector<8x8xf32>
    tpu.vector_store %arg9[%c0_61, %c48], %137 {strides = array<i32>} : memref<8x64xf32, #tpu.memory_space<vmem>>, vector<8x8xf32>,
    %139 = vector.extract_strided_slice %12 {offsets = [0, 56], sizes = [8, 8], strides = [1, 1]} : vector<8x64xf32> to vector<8x8xf32>
    %140 = vector.extract_strided_slice %19 {offsets = [0, 56], sizes = [16, 8], strides = [1, 1]} : vector<16x64xf32> to vector<16x8xf32>
    %141 = vector.extract_strided_slice %26 {offsets = [0, 56], sizes = [16, 8], strides = [1, 1]} : vector<16x64xf32> to vector<16x8xf32>
    "tpu.trace_start"() <{level = 10 : i32, message = "qe,ke->qk"}> : () -> ()
    %cst_62 = arith.constant dense<0.000000e+00> : vector<8x16xf32>
    %142 = tpu.matmul %139, %140, %cst_62 {dimension_numbers = #tpu.dot_dimension_numbers<[1], [1], [0], [0], [0, 0, 1, 0], [], []>} : vector<8x8xf32>, vector<16x8xf32>, vector<8x16xf32> -> vector<8x16xf32>
    "tpu.trace_stop"() : () -> ()
    %cst_63 = arith.constant dense<0xFF800000> : vector<8xf32>
    %143 = vector.multi_reduction <maximumf>, %142, %cst_63 [1] : vector<8x16xf32> to vector<8xf32>
    %144 = vector.shape_cast %143 : vector<8xf32> to vector<8x1xf32>
    %145 = vector.broadcast %144 : vector<8x1xf32> to vector<8x16xf32>
    %146 = arith.subf %142, %145 : vector<8x16xf32>
    %147 = math.exp %146 : vector<8x16xf32>
    %cst_64 = arith.constant dense<0.000000e+00> : vector<8xf32>
    %148 = vector.multi_reduction <add>, %147, %cst_64 [1] : vector<8x16xf32> to vector<8xf32>
    %149 = vector.shape_cast %148 : vector<8xf32> to vector<8x1xf32>
    %150 = tpu.reciprocal %149 : vector<8x1xf32> -> vector<8x1xf32>
    %151 = vector.broadcast %150 : vector<8x1xf32> to vector<8x16xf32>
    %152 = arith.mulf %147, %151 : vector<8x16xf32>
    %cst_65 = arith.constant dense<0.000000e+00> : vector<8x8xf32>
    %153 = tpu.matmul %152, %141, %cst_65 {dimension_numbers = #tpu.dot_dimension_numbers<[1], [0], [0], [1], [0, 0, 1, 1], [], []>} : vector<8x16xf32>, vector<16x8xf32>, vector<8x8xf32> -> vector<8x8xf32>
    %c0_66 = arith.constant 0 : index
    %c56 = arith.constant 56 : index
    %154 = vector.load %arg9[%c0_66, %c56] : memref<8x64xf32, #tpu.memory_space<vmem>>, vector<8x8xf32>
    tpu.vector_store %arg9[%c0_66, %c56], %153 {strides = array<i32>} : memref<8x64xf32, #tpu.memory_space<vmem>>, vector<8x8xf32>,
    %c0_67 = arith.constant 0 : index
    %c0_68 = arith.constant 0 : index
    %155 = vector.load %arg9[%c0_67, %c0_68] : memref<8x64xf32, #tpu.memory_space<vmem>>, vector<8x64xf32>
    %c0_69 = arith.constant 0 : index
    %c0_70 = arith.constant 0 : index
    %156 = vector.load %arg6[%c0_69, %c0_70] : memref<64x64xf32, #tpu.memory_space<vmem>>, vector<64x64xf32>
    %cst_71 = arith.constant dense<0.000000e+00> : vector<8x64xf32>
    %157 = tpu.matmul %155, %156, %cst_71 {dimension_numbers = #tpu.dot_dimension_numbers<[1], [0], [0], [1], [0, 0, 1, 1], [], []>} : vector<8x64xf32>, vector<64x64xf32>, vector<8x64xf32> -> vector<8x64xf32>
    %c0_72 = arith.constant 0 : index
    %c0_73 = arith.constant 0 : index
    %158 = vector.load %arg7[%c0_72, %c0_73] : memref<1x64xf32, #tpu.memory_space<vmem>>, vector<1x64xf32>
    %159 = vector.broadcast %158 : vector<1x64xf32> to vector<8x64xf32>
    %160 = arith.addf %157, %159 : vector<8x64xf32>
    %c0_74 = arith.constant 0 : index
    %c0_75 = arith.constant 0 : index
    %c0_76 = arith.constant 0 : index
    %161 = vector.load %arg8[%c0_74, %c0_75, %c0_76] : memref<1x8x64xf32, #tpu.memory_space<vmem>>, vector<1x8x64xf32>
    %162 = vector.shape_cast %161 : vector<1x8x64xf32> to vector<8x64xf32>
    %163 = vector.shape_cast %160 : vector<8x64xf32> to vector<1x8x64xf32>
    tpu.vector_store %arg8[%c0_74, %c0_75, %c0_76], %163 {strides = array<i32>} : memref<1x8x64xf32, #tpu.memory_space<vmem>>, vector<1x8x64xf32>,
    return
  }
  func.func @transform_0(%arg0: i32) -> (i32, i32, i32) {
    %c0_i32 = arith.constant 0 : i32
    %c0_i32_0 = arith.constant 0 : i32
    %c0_i32_1 = arith.constant 0 : i32
    return %arg0, %c0_i32, %c0_i32_0 : i32, i32, i32
  }
  func.func @transform_1(%arg0: i32) -> (i32, i32, i32) {
    %c0_i32 = arith.constant 0 : i32
    %c0_i32_0 = arith.constant 0 : i32
    %c0_i32_1 = arith.constant 0 : i32
    return %arg0, %c0_i32, %c0_i32_0 : i32, i32, i32
  }
  func.func @transform_2(%arg0: i32) -> (i32, i32, i32) {
    %c0_i32 = arith.constant 0 : i32
    %c0_i32_0 = arith.constant 0 : i32
    %c0_i32_1 = arith.constant 0 : i32
    return %arg0, %c0_i32, %c0_i32_0 : i32, i32, i32
  }
  func.func @transform_3(%arg0: i32) -> (i32, i32, i32) {
    %c0_i32 = arith.constant 0 : i32
    %c0_i32_0 = arith.constant 0 : i32
    %c0_i32_1 = arith.constant 0 : i32
    %c0_i32_2 = arith.constant 0 : i32
    return %c0_i32, %c0_i32_0, %c0_i32_1 : i32, i32, i32
  }
  func.func @transform_4(%arg0: i32) -> (i32, i32, i32) {
    %c0_i32 = arith.constant 0 : i32
    %c0_i32_0 = arith.constant 0 : i32
    %c0_i32_1 = arith.constant 0 : i32
    %c0_i32_2 = arith.constant 0 : i32
    return %c0_i32, %c0_i32_0, %c0_i32_1 : i32, i32, i32
  }
  func.func @transform_5(%arg0: i32) -> (i32, i32) {
    %c0_i32 = arith.constant 0 : i32
    %c0_i32_0 = arith.constant 0 : i32
    %c0_i32_1 = arith.constant 0 : i32
    return %c0_i32, %c0_i32_0 : i32, i32
  }
  func.func @transform_6(%arg0: i32) -> (i32, i32) {
    %c0_i32 = arith.constant 0 : i32
    %c0_i32_0 = arith.constant 0 : i32
    %c0_i32_1 = arith.constant 0 : i32
    return %c0_i32, %c0_i32_0 : i32, i32
  }
  func.func @transform_7(%arg0: i32) -> (i32, i32, i32) {
    %c0_i32 = arith.constant 0 : i32
    %c0_i32_0 = arith.constant 0 : i32
    %c0_i32_1 = arith.constant 0 : i32
    return %arg0, %c0_i32, %c0_i32_0 : i32, i32, i32
  }
}

</mosaic_0001>

<llo_original>
// kernel: _lambda_.1
$region0: #{_lambda_.1}
  #allocation0 [shape = 'u32[]', space=smem, size = 0x4, offset = 0x4, fixed_abs, tag = 'smem constant byte address 0x4 - core index']
  #allocation1 [shape = 'u32[72,128]{1,0:T(1,128)}', space=vmem, size = 0x9000, scoped, tag = 'internal scratch']
  #allocation2 [shape = 'f32[8,64]{1,0:T(8,128)}', space=vmem, size = 0x1000, scoped, tag = 'scratch operand']
  %s0 = inlined_call_operand.vmem [shape: f32[2,8,64], index: 0, kind: input, shape index: {}]
  %s1 = inlined_call_operand.vmem [shape: f32[2,16,64], index: 1, kind: input, shape index: {}]
  %s2 = inlined_call_operand.vmem [shape: f32[2,16,64], index: 2, kind: input, shape index: {}]
  %s3 = inlined_call_operand.vmem [shape: f32[3,64,64], index: 3, kind: input, shape index: {}]
  %s4 = inlined_call_operand.vmem [shape: f32[3,1,64], index: 4, kind: input, shape index: {}]
  %s5 = inlined_call_operand.vmem [shape: f32[64,64], index: 5, kind: input, shape index: {}]
  %s6 = inlined_call_operand.vmem [shape: f32[1,64], index: 6, kind: input, shape index: {}]
  %s7 = inlined_call_operand.hbm [shape: f32[2,8,64], index: 7, kind: output, shape index: {}]
  %s8 = sld [smem:[#allocation0]]
  $region61: #{_lambda_.1} parent=0
    _
  %s10 = ssub.s32 1, %s8
  %s11 = scalar_select 0, %s10, %s8
  $region1: #{_lambda_.1} parent=0
    #allocation3 [shape = 'u8[8192]{0}', space=vmem, size = 0x2000, scoped, tag = 'output window, operand 0']
    #allocation4 [shape = 's32[2]{0}', space=sflag, size = 0x8, scoped, tag = 'scoped memory for _lambda_.1']
    %12 = vsyncpa [#allocation4], 0
    %s13 = scalar_lea.sflag [#allocation4], 1
    %14 = vsyncpa %s13, 0
    loop: start=0, step=1, limit=4
    $region2: #{_lambda_.1} parent=1 // loop_pre_header
      _
    $region3: #{_lambda_.1} parent=1 // loop_header
      %s16 = sphi 0, %s20
      %p17 = scmp.ge.s32.totalorder %s16, 4
      %s26 = sphi 0, %s28
      %s29 = sphi 0, %s26
      %s30 = sphi 0, %s29
      %s46 = sphi 0, %s30
      %s52 = sphi 0, %s54
      %s55 = sphi 0, %s52
      %s56 = sphi 0, %s55
      %s72 = sphi 0, %s56
      %s78 = sphi 0, %s80
      %s81 = sphi 0, %s78
      %s82 = sphi 0, %s81
      %s98 = sphi 0, %s82
      %s102 = sphi 0, %s102
      %s104 = sphi 0, %s102
      %s105 = sphi 0, %s104
      %s119 = sphi 0, %s105
      %s123 = sphi 0, %s123
      %s125 = sphi 0, %s123
      %s126 = sphi 0, %s125
      %s140 = sphi 0, %s126
      %s144 = sphi 0, %s144
      %s146 = sphi 0, %s144
      %s147 = sphi 0, %s146
      %s161 = sphi 0, %s147
      %s165 = sphi 0, %s165
      %s167 = sphi 0, %s165
      %s168 = sphi 0, %s167
      %s182 = sphi 0, %s168
      %s188 = sphi 0, %s190
      %s191 = sphi 0, %s188
      %s192 = sphi 0, %s191
      %s208 = sphi 0, %s192
    $region4: #{_lambda_.1} parent=1 // loop_header_branch
      %19 = sbr.rel (%p17) target = $region8
    $region5: #{_lambda_.1} parent=1 // loop_body
      %s21 = ssub.s32 %s16, 1
      %s22 = ssub.s32 %s16, 2
      %s23 = sadd.s32 %s16, 1
      %s24 = ssub.s32 %s16, %s23
      %p25 = scmp.eq.s32.totalorder %s24, 0
      %s27 = sadd.s32 %s26, 1
      %s28 = scalar_select %p25, %s26, %s27
      %p31 = pneg %p25
      %p32 = scmp.eq.s32.totalorder %s16, 1
      %p33 = por %p31, %p32
      %p34 = scmp.ne.s32.totalorder %s26, %s29
      %p35 = scmp.eq.s32.totalorder %s16, 0
      %p36 = por %p34, %p35
      %p37 = scmp.ne.s32.totalorder %s26, %s29
      %p38 = scmp.eq.s32.totalorder %s21, 1
      %p39 = por %p37, %p38
      %p40 = scmp.ne.s32.totalorder %s29, %s30
      %p41 = scmp.eq.s32.totalorder %s21, 0
      %p42 = por %p40, %p41
      %p43 = scmp.ne.s32.totalorder %s29, %s30
      %p44 = scmp.eq.s32.totalorder %s22, 1
      %p45 = por %p43, %p44
      %p47 = scmp.ne.s32.totalorder %s30, %s46
      %p48 = scmp.eq.s32.totalorder %s22, 0
      %p49 = por %p47, %p48
      %s50 = ssub.s32 %s16, %s23
      %p51 = scmp.eq.s32.totalorder %s50, 0
      %s53 = sadd.s32 %s52, 1
      %s54 = scalar_select %p51, %s52, %s53
      %p57 = pneg %p51
      %p58 = scmp.eq.s32.totalorder %s16, 1
      %p59 = por %p57, %p58
      %p60 = scmp.ne.s32.totalorder %s52, %s55
      %p61 = scmp.eq.s32.totalorder %s16, 0
      %p62 = por %p60, %p61
      %p63 = scmp.ne.s32.totalorder %s52, %s55
      %p64 = scmp.eq.s32.totalorder %s21, 1
      %p65 = por %p63, %p64
      %p66 = scmp.ne.s32.totalorder %s55, %s56
      %p67 = scmp.eq.s32.totalorder %s21, 0
      %p68 = por %p66, %p67
      %p69 = scmp.ne.s32.totalorder %s55, %s56
      %p70 = scmp.eq.s32.totalorder %s22, 1
      %p71 = por %p69, %p70
      %p73 = scmp.ne.s32.totalorder %s56, %s72
      %p74 = scmp.eq.s32.totalorder %s22, 0
      %p75 = por %p73, %p74
      %s76 = ssub.s32 %s16, %s23
      %p77 = scmp.eq.s32.totalorder %s76, 0
      %s79 = sadd.s32 %s78, 1
      %s80 = scalar_select %p77, %s78, %s79
      %p83 = pneg %p77
      %p84 = scmp.eq.s32.totalorder %s16, 1
      %p85 = por %p83, %p84
      %p86 = scmp.ne.s32.totalorder %s78, %s81
      %p87 = scmp.eq.s32.totalorder %s16, 0
      %p88 = por %p86, %p87
      %p89 = scmp.ne.s32.totalorder %s78, %s81
      %p90 = scmp.eq.s32.totalorder %s21, 1
      %p91 = por %p89, %p90
      %p92 = scmp.ne.s32.totalorder %s81, %s82
      %p93 = scmp.eq.s32.totalorder %s21, 0
      %p94 = por %p92, %p93
      %p95 = scmp.ne.s32.totalorder %s81, %s82
      %p96 = scmp.eq.s32.totalorder %s22, 1
      %p97 = por %p95, %p96
      %p99 = scmp.ne.s32.totalorder %s82, %s98
      %p100 = scmp.eq.s32.totalorder %s22, 0
      %p101 = por %p99, %p100
      %s103 = sadd.s32 %s102, 1
      %p106 = scmp.eq.s32.totalorder %s16, 1
      %p107 = scmp.ne.s32.totalorder %s102, %s104
      %p108 = scmp.eq.s32.totalorder %s16, 0
      %p109 = por %p107, %p108
      %p110 = scmp.ne.s32.totalorder %s102, %s104
      %p111 = scmp.eq.s32.totalorder %s21, 1
      %p112 = por %p110, %p111
      %p113 = scmp.ne.s32.totalorder %s104, %s105
      %p114 = scmp.eq.s32.totalorder %s21, 0
      %p115 = por %p113, %p114
      %p116 = scmp.ne.s32.totalorder %s104, %s105
      %p117 = scmp.eq.s32.totalorder %s22, 1
      %p118 = por %p116, %p117
      %p120 = scmp.ne.s32.totalorder %s105, %s119
      %p121 = scmp.eq.s32.totalorder %s22, 0
      %p122 = por %p120, %p121
      %s124 = sadd.s32 %s123, 1
      %p127 = scmp.eq.s32.totalorder %s16, 1
      %p128 = scmp.ne.s32.totalorder %s123, %s125
      %p129 = scmp.eq.s32.totalorder %s16, 0
      %p130 = por %p128, %p129
      %p131 = scmp.ne.s32.totalorder %s123, %s125
      %p132 = scmp.eq.s32.totalorder %s21, 1
      %p133 = por %p131, %p132
      %p134 = scmp.ne.s32.totalorder %s125, %s126
      %p135 = scmp.eq.s32.totalorder %s21, 0
      %p136 = por %p134, %p135
      %p137 = scmp.ne.s32.totalorder %s125, %s126
      %p138 = scmp.eq.s32.totalorder %s22, 1
      %p139 = por %p137, %p138
      %p141 = scmp.ne.s32.totalorder %s126, %s140
      %p142 = scmp.eq.s32.totalorder %s22, 0
      %p143 = por %p141, %p142
      %s145 = sadd.s32 %s144, 1
      %p148 = scmp.eq.s32.totalorder %s16, 1
      %p149 = scmp.ne.s32.totalorder %s144, %s146
      %p150 = scmp.eq.s32.totalorder %s16, 0
      %p151 = por %p149, %p150
      %p152 = scmp.ne.s32.totalorder %s144, %s146
      %p153 = scmp.eq.s32.totalorder %s21, 1
      %p154 = por %p152, %p153
      %p155 = scmp.ne.s32.totalorder %s146, %s147
      %p156 = scmp.eq.s32.totalorder %s21, 0
      %p157 = por %p155, %p156
      %p158 = scmp.ne.s32.totalorder %s146, %s147
      %p159 = scmp.eq.s32.totalorder %s22, 1
      %p160 = por %p158, %p159
      %p162 = scmp.ne.s32.totalorder %s147, %s161
      %p163 = scmp.eq.s32.totalorder %s22, 0
      %p164 = por %p162, %p163
      %s166 = sadd.s32 %s165, 1
      %p169 = scmp.eq.s32.totalorder %s16, 1
      %p170 = scmp.ne.s32.totalorder %s165, %s167
      %p171 = scmp.eq.s32.totalorder %s16, 0
      %p172 = por %p170, %p171
      %p173 = scmp.ne.s32.totalorder %s165, %s167
      %p174 = scmp.eq.s32.totalorder %s21, 1
      %p175 = por %p173, %p174
      %p176 = scmp.ne.s32.totalorder %s167, %s168
      %p177 = scmp.eq.s32.totalorder %s21, 0
      %p178 = por %p176, %p177
      %p179 = scmp.ne.s32.totalorder %s167, %s168
      %p180 = scmp.eq.s32.totalorder %s22, 1
      %p181 = por %p179, %p180
      %p183 = scmp.ne.s32.totalorder %s168, %s182
      %p184 = scmp.eq.s32.totalorder %s22, 0
      %p185 = por %p183, %p184
      %s186 = ssub.s32 %s16, %s23
      %p187 = scmp.eq.s32.totalorder %s186, 0
      %s189 = sadd.s32 %s188, 1
      %s190 = scalar_select %p187, %s188, %s189
      %p193 = pneg %p187
      %p194 = scmp.eq.s32.totalorder %s16, 1
      %p195 = por %p193, %p194
      %p196 = scmp.ne.s32.totalorder %s188, %s191
      %p197 = scmp.eq.s32.totalorder %s16, 0
      %p198 = por %p196, %p197
      %p199 = scmp.ne.s32.totalorder %s188, %s191
      %p200 = scmp.eq.s32.totalorder %s21, 1
      %p201 = por %p199, %p200
      %p202 = scmp.ne.s32.totalorder %s191, %s192
      %p203 = scmp.eq.s32.totalorder %s21, 0
      %p204 = por %p202, %p203
      %p205 = scmp.ne.s32.totalorder %s191, %s192
      %p206 = scmp.eq.s32.totalorder %s22, 1
      %p207 = por %p205, %p206
      %p209 = scmp.ne.s32.totalorder %s192, %s208
      %p210 = scmp.eq.s32.totalorder %s22, 0
      %p211 = por %p209, %p210
      %p212 = scmp.le.s32.totalorder 1, %s16
      %p213 = scmp.lt.s32.totalorder %s16, 3
      %p214 = pnand %p212, %p213
      %p215 = pneg %p214
      // Predicated region
      $region9: #{_lambda_.1} parent=5 // pred_check
        _
      $region10: #{_lambda_.1} parent=5 // pred_check_branch
        %217 = sbr.rel (%p214) target = $region12
      $region11: #{_lambda_.1} parent=5 // pred_region
        %s218 = ssub.s32 %s16, 1
        // Predicated region
        $region13: #{_lambda_.1} parent=11 // pred_check
          %p219 = pneg %p115
        $region14: #{_lambda_.1} parent=11 // pred_check_branch
          %221 = sbr.rel (%p219) target = $region16
        $region15: #{_lambda_.1} parent=11 // pred_region
          _
        $region16: #{_lambda_.1} parent=11 // pred_fallthru
          _
        // Predicated region
        $region17: #{_lambda_.1} parent=11 // pred_check
          %p222 = pneg %p136
        $region18: #{_lambda_.1} parent=11 // pred_check_branch
          %224 = sbr.rel (%p222) target = $region20
        $region19: #{_lambda_.1} parent=11 // pred_region
          _
        $region20: #{_lambda_.1} parent=11 // pred_fallthru
          _
        // Predicated region
        $region21: #{_lambda_.1} parent=11 // pred_check
          %p225 = pneg %p157
        $region22: #{_lambda_.1} parent=11 // pred_check_branch
          %227 = sbr.rel (%p225) target = $region24
        $region23: #{_lambda_.1} parent=11 // pred_region
          _
        $region24: #{_lambda_.1} parent=11 // pred_fallthru
          _
        // Predicated region
        $region25: #{_lambda_.1} parent=11 // pred_check
          %p228 = pneg %p178
        $region26: #{_lambda_.1} parent=11 // pred_check_branch
          %230 = sbr.rel (%p228) target = $region28
        $region27: #{_lambda_.1} parent=11 // pred_region
          _
        $region28: #{_lambda_.1} parent=11 // pred_fallthru
          _
      $region12: #{_lambda_.1} parent=5 // pred_fallthru
        _
      %p231 = scmp.lt.s32.totalorder %s16, 2
      // Predicated region
      $region29: #{_lambda_.1} parent=5 // pred_check
        %p232 = pneg %p231
      $region30: #{_lambda_.1} parent=5 // pred_check_branch
        %234 = sbr.rel (%p232) target = $region32
      $region31: #{_lambda_.1} parent=5 // pred_region
        // Predicated region
        $region33: #{_lambda_.1} parent=31 // pred_check
          %p235 = pneg %p36
        $region34: #{_lambda_.1} parent=31 // pred_check_branch
          %237 = sbr.rel (%p235) target = $region36
        $region35: #{_lambda_.1} parent=31 // pred_region
          %p238 = scmp.lt.s32.totalorder %s16, 1
          %s239 = scalar_select %p238, %s16, 1
          %s240 = smul.addr %s239, 8
          %s241 = scalar_lea.vmem %s0, %s240
        $region36: #{_lambda_.1} parent=31 // pred_fallthru
          _
        // Predicated region
        $region37: #{_lambda_.1} parent=31 // pred_check
          %p242 = pneg %p62
        $region38: #{_lambda_.1} parent=31 // pred_check_branch
          %244 = sbr.rel (%p242) target = $region40
        $region39: #{_lambda_.1} parent=31 // pred_region
          %p245 = scmp.lt.s32.totalorder %s16, 1
          %s246 = scalar_select %p245, %s16, 1
          %s247 = smul.addr %s246, 2
          %s248 = smul.addr %s247, 8
          %s249 = scalar_lea.vmem %s1, %s248
        $region40: #{_lambda_.1} parent=31 // pred_fallthru
          _
        // Predicated region
        $region41: #{_lambda_.1} parent=31 // pred_check
          %p250 = pneg %p88
        $region42: #{_lambda_.1} parent=31 // pred_check_branch
          %252 = sbr.rel (%p250) target = $region44
        $region43: #{_lambda_.1} parent=31 // pred_region
          %p253 = scmp.lt.s32.totalorder %s16, 1
          %s254 = scalar_select %p253, %s16, 1
          %s255 = smul.addr %s254, 2
          %s256 = smul.addr %s255, 8
          %s257 = scalar_lea.vmem %s2, %s256
        $region44: #{_lambda_.1} parent=31 // pred_fallthru
          _
      $region32: #{_lambda_.1} parent=5 // pred_fallthru
        _
      %p258 = scmp.le.s32.totalorder 1, %s16
      %p259 = scmp.lt.s32.totalorder %s16, 3
      %p260 = pnand %p258, %p259
      %p261 = pneg %p260
      // Predicated region
      $region45: #{_lambda_.1} parent=5 // pred_check
        _
      $region46: #{_lambda_.1} parent=5 // pred_check_branch
        %263 = sbr.rel (%p260) target = $region48
      $region47: #{_lambda_.1} parent=5 // pred_region
        %s264 = ssub.s32 %s16, 1
        %p265 = scmp.lt.s32.totalorder %s21, 1
        %s266 = scalar_select %p265, %s21, 1
        %s267 = smul.addr %s266, 8
        %s268 = scalar_lea.vmem %s0, %s267
        %p269 = pneg %p42
        %p270 = pneg %p39
        %p271 = scmp.lt.s32.totalorder %s21, 1
        %s272 = scalar_select %p271, %s21, 1
        %s273 = smul.addr %s272, 2
        %s274 = smul.addr %s273, 8
        %s275 = scalar_lea.vmem %s1, %s274
        %p276 = pneg %p68
        %p277 = pneg %p65
        %p278 = scmp.lt.s32.totalorder %s21, 1
        %s279 = scalar_select %p278, %s21, 1
        %s280 = smul.addr %s279, 2
        %s281 = smul.addr %s280, 8
        %s282 = scalar_lea.vmem %s2, %s281
        %p283 = pneg %p94
        %p284 = pneg %p91
        %p285 = pneg %p115
        %p286 = pneg %p112
        %p287 = pneg %p136
        %p288 = pneg %p133
        %p289 = pneg %p157
        %p290 = pneg %p154
        %p291 = pneg %p178
        %p292 = pneg %p175
        %p293 = pneg %p204
        %p294 = pneg %p201
        %s295 = sand.u32 %s191, 1
        %s296 = scalar_lea.sflag [#allocation4], %s295
        %s297 = sand.u32 %s191, 1
        %s298 = smul.addr %s297, 8
        %s299 = scalar_lea.vmem [#allocation3], %s298
        %p300 = scmp.lt.s32.totalorder %s21, 1
        %s301 = scalar_select %p300, %s21, 1
        %s302 = smul.addr %s301, 8
        %s303 = scalar_lea.vmem %s0, %s302
        %p304 = scmp.lt.s32.totalorder %s21, 1
        %s305 = scalar_select %p304, %s21, 1
        %s306 = smul.addr %s305, 2
        %s307 = smul.addr %s306, 8
        %s308 = scalar_lea.vmem %s1, %s307
        %p309 = scmp.lt.s32.totalorder %s21, 1
        %s310 = scalar_select %p309, %s21, 1
        %s311 = smul.addr %s310, 2
        %s312 = smul.addr %s311, 8
        %s313 = scalar_lea.vmem %s2, %s312
        %v314 = vld [vmem:[%s303] sm:$0xff]
        %v315 = vld [vmem:[%s308] sm:$0xff]
        %v316 = vld [vmem:[%s308 + $0x8] sm:$0xff]
        %v317 = vld [vmem:[%s313] sm:$0xff]
        %v318 = vld [vmem:[%s313 + $0x8] sm:$0xff]
        %v319 = vld [vmem:[%s3] sm:$0xff]
        %v320 = vld [vmem:[%s3 + $0x8] sm:$0xff]
        %v321 = vld [vmem:[%s3 + $0x10] sm:$0xff]
        %v322 = vld [vmem:[%s3 + $0x18] sm:$0xff]
        %v323 = vld [vmem:[%s3 + $0x20] sm:$0xff]
        %v324 = vld [vmem:[%s3 + $0x28] sm:$0xff]
        %v325 = vld [vmem:[%s3 + $0x30] sm:$0xff]
        %v326 = vld [vmem:[%s3 + $0x38] sm:$0xff]
        %v327 = vld [vmem:[%s4] sm:$0x1]
        %v329 = vperm.slane %v327, 0
        %vm331 = vcmask 523264
        %v333 = vsel %vm331, %v314, 0
        %335 = vmatpush.msra.mxu0 0.0
        %336 = vmatpush.msra.mxu0 0.0
        %337 = vmatpush.msra.mxu0 0.0
        %338 = vmatpush.msra.mxu0 0.0
        %339 = vmatpush.msra.mxu0 0.0
        %340 = vmatpush.msra.mxu0 0.0
        %341 = vmatpush.msra.mxu0 0.0
        %342 = vmatpush.msra.mxu0 0.0
        %343 = vmatpush.msra.mxu0 %v326
        %344 = vmatpush.msra.mxu0 %v325
        %345 = vmatpush.msra.mxu0 %v324
        %346 = vmatpush.msra.mxu0 %v323
        %347 = vmatpush.msra.mxu0 %v322
        %348 = vmatpush.msra.mxu0 %v321
        %349 = vmatpush.msra.mxu0 %v320
        %350 = vmatpush.msra.mxu0 %v319
        %351 = vmatmul.f32.gmra.mxu0 %v333
        %v352 = vpop.f32.mrf.mxu0
        %v353 = vadd.f32 %v329, %v352
        %354 = vdwg.mxu0
        %s355 = scalar_lea.vmem %s3, 64
        %v356 = vld [vmem:[%s355] sm:$0xff]
        %v357 = vld [vmem:[%s355 + $0x8] sm:$0xff]
        %v358 = vld [vmem:[%s355 + $0x10] sm:$0xff]
        %v359 = vld [vmem:[%s355 + $0x18] sm:$0xff]
        %v360 = vld [vmem:[%s355 + $0x20] sm:$0xff]
        %v361 = vld [vmem:[%s355 + $0x28] sm:$0xff]
        %v362 = vld [vmem:[%s355 + $0x30] sm:$0xff]
        %v363 = vld [vmem:[%s355 + $0x38] sm:$0xff]
        %s364 = scalar_lea.vmem %s4, 1
        %v365 = vld [vmem:[%s364] sm:$0x1]
        %v367 = vperm.slane %v365, 0
        %v370 = vsel %vm331, %v315, 0
        %v373 = vsel %vm331, %v316, 0
        %375 = vmatpush.msra.mxu0 0.0
        %376 = vmatpush.msra.mxu0 0.0
        %377 = vmatpush.msra.mxu0 0.0
        %378 = vmatpush.msra.mxu0 0.0
        %379 = vmatpush.msra.mxu0 0.0
        %380 = vmatpush.msra.mxu0 0.0
        %381 = vmatpush.msra.mxu0 0.0
        %382 = vmatpush.msra.mxu0 0.0
        %383 = vmatpush.msra.mxu0 %v363
        %384 = vmatpush.msra.mxu0 %v362
        %385 = vmatpush.msra.mxu0 %v361
        %386 = vmatpush.msra.mxu0 %v360
        %387 = vmatpush.msra.mxu0 %v359
        %388 = vmatpush.msra.mxu0 %v358
        %389 = vmatpush.msra.mxu0 %v357
        %390 = vmatpush.msra.mxu0 %v356
        %391 = vmatmul.f32.gmra.mxu0 %v370
        %v392 = vpop.f32.mrf.mxu0
        %v393 = vadd.f32 %v367, %v392
        %394 = vmatmul.f32.gmra.mxu0 %v373
        %v395 = vpop.f32.mrf.mxu0
        %v396 = vadd.f32 %v367, %v395
        %397 = vdwg.mxu0
        %s398 = scalar_lea.vmem %s3, 128
        %v399 = vld [vmem:[%s398] sm:$0xff]
        %v400 = vld [vmem:[%s398 + $0x8] sm:$0xff]
        %v401 = vld [vmem:[%s398 + $0x10] sm:$0xff]
        %v402 = vld [vmem:[%s398 + $0x18] sm:$0xff]
        %v403 = vld [vmem:[%s398 + $0x20] sm:$0xff]
        %v404 = vld [vmem:[%s398 + $0x28] sm:$0xff]
        %v405 = vld [vmem:[%s398 + $0x30] sm:$0xff]
        %v406 = vld [vmem:[%s398 + $0x38] sm:$0xff]
        %s407 = scalar_lea.vmem %s4, 2
        %v408 = vld [vmem:[%s407] sm:$0x1]
        %v410 = vperm.slane %v408, 0
        %v413 = vsel %vm331, %v317, 0
        %v416 = vsel %vm331, %v318, 0
        %418 = vmatpush.msra.mxu0 0.0
        %419 = vmatpush.msra.mxu0 0.0
        %420 = vmatpush.msra.mxu0 0.0
        %421 = vmatpush.msra.mxu0 0.0
        %422 = vmatpush.msra.mxu0 0.0
        %423 = vmatpush.msra.mxu0 0.0
        %424 = vmatpush.msra.mxu0 0.0
        %425 = vmatpush.msra.mxu0 0.0
        %426 = vmatpush.msra.mxu0 %v406
        %427 = vmatpush.msra.mxu0 %v405
        %428 = vmatpush.msra.mxu0 %v404
        %429 = vmatpush.msra.mxu0 %v403
        %430 = vmatpush.msra.mxu0 %v402
        %431 = vmatpush.msra.mxu0 %v401
        %432 = vmatpush.msra.mxu0 %v400
        %433 = vmatpush.msra.mxu0 %v399
        %434 = vmatmul.f32.gmra.mxu0 %v413
        %v435 = vpop.f32.mrf.mxu0
        %v436 = vadd.f32 %v410, %v435
        %437 = vmatmul.f32.gmra.mxu0 %v416
        %v438 = vpop.f32.mrf.mxu0
        %v439 = vadd.f32 %v410, %v438
        %440 = vdwg.mxu0
        %vm441 = vcmask 64512
        %v443 = vsel %vm441, %v353, 0
        %v446 = vsel %vm441, %v393, 0
        %v449 = vsel %vm441, %v396, 0
        %451 = vmatpush.xpose.msra.mxu0 0.0
        %452 = vmatpush.xpose.msra.mxu0 0.0
        %453 = vmatpush.xpose.msra.mxu0 0.0
        %454 = vmatpush.xpose.msra.mxu0 0.0
        %455 = vmatpush.xpose.msra.mxu0 0.0
        %456 = vmatpush.xpose.msra.mxu0 0.0
        %457 = vmatpush.xpose.msra.mxu0 0.0
        %458 = vmatpush.xpose.msra.mxu0 0.0
        %459 = vmatpush.xpose.msra.mxu0 0.0
        %460 = vmatpush.xpose.msra.mxu0 0.0
        %461 = vmatpush.xpose.msra.mxu0 0.0
        %462 = vmatpush.xpose.msra.mxu0 0.0
        %463 = vmatpush.xpose.msra.mxu0 0.0
        %464 = vmatpush.xpose.msra.mxu0 0.0
        %465 = vmatpush.xpose.msra.mxu0 %v449
        %466 = vmatpush.xpose.msra.mxu0 %v446
        %467 = vmatmul.f32.gmra.mxu0 %v443
        %v468 = vpop.f32.mrf.mxu0
        %v469 = vadd.f32 0.0, %v468
        %470 = vdwg.mxu0
        %vm471 = vcmask 130048
        %v472 = vsel %vm471, %v469, -inf
        %473 = vmax.xlane.f32.xlu0 %v472
        %v474 = vpop.xlane.xlu0 %473
        %v475 = vsub.f32 %v469, %v474
        %v476 = vmul.f32 %v475, 1.442695
        %v477 = vpow.pop %v476
        %v478 = vsel %vm471, %v477, 0.0
        %479 = vadd.xlane.f32.xlu0 %v478
        %v480 = vpop.xlane.xlu0 %479
        %v481 = vrcp.pop %v480
        %v482 = vmul.f32 %v480, %v481
        %v483 = vsub.f32 1.0, %v482
        %v484 = vmul.f32 %v481, %v483
        %v485 = vadd.f32 %v481, %v484
        %vm486 = vweird.f32 %v480
        %vm487 = vweird.f32 %v481
        %vm488 = vmor %vm486, %vm487
        %v489 = vsel %vm488, %v481, %v485
        %v490 = vand.u32 2147483647, %v480
        %vm491 = vcmp.eq.f32.partialorder %v490, 8.507059e+37
        %v492 = vand.u32 %v480, 2147483648
        %v493 = vor.u32 1.1754944e-38, %v492
        %v494 = vsel %vm491, %v493, %v489
        %v495 = vmul.f32 %v477, %v494
        %v497 = vsel %vm471, %v495, 0
        %499 = vmatpush.msra.mxu0 0.0
        %500 = vmatpush.msra.mxu0 0.0
        %501 = vmatpush.msra.mxu0 0.0
        %502 = vmatpush.msra.mxu0 0.0
        %503 = vmatpush.msra.mxu0 0.0
        %504 = vmatpush.msra.mxu0 0.0
        %505 = vmatpush.msra.mxu0 0.0
        %506 = vmatpush.msra.mxu0 0.0
        %507 = vmatpush.msra.mxu0 0.0
        %508 = vmatpush.msra.mxu0 0.0
        %509 = vmatpush.msra.mxu0 0.0
        %510 = vmatpush.msra.mxu0 0.0
        %511 = vmatpush.msra.mxu0 0.0
        %512 = vmatpush.msra.mxu0 0.0
        %513 = vmatpush.msra.mxu0 %v439
        %514 = vmatpush.msra.mxu0 %v436
        %515 = vmatmul.f32.gmra.mxu0 %v497
        %v516 = vpop.f32.mrf.mxu0
        %v517 = vadd.f32 0.0, %v516
        %518 = vdwg.mxu0
        %519 = vst.msk [vmem:[#allocation2] sm:$0xff] %vm441, %v517
        %520 = vrot.lane.b32.xlu0 %v353, 120
        %v521 = vpop.permute.xlu0 %520
        %522 = vrot.lane.b32.xlu0 %v393, 120
        %v523 = vpop.permute.xlu0 %522
        %524 = vrot.lane.b32.xlu0 %v396, 120
        %v525 = vpop.permute.xlu0 %524
        %v526 = vsel %vm441, %v521, 0
        %v528 = vsel %vm441, %v523, 0
        %v530 = vsel %vm441, %v525, 0
        %532 = vmatpush.xpose.msra.mxu0 0.0
        %533 = vmatpush.xpose.msra.mxu0 0.0
        %534 = vmatpush.xpose.msra.mxu0 0.0
        %535 = vmatpush.xpose.msra.mxu0 0.0
        %536 = vmatpush.xpose.msra.mxu0 0.0
        %537 = vmatpush.xpose.msra.mxu0 0.0
        %538 = vmatpush.xpose.msra.mxu0 0.0
        %539 = vmatpush.xpose.msra.mxu0 0.0
        %540 = vmatpush.xpose.msra.mxu0 0.0
        %541 = vmatpush.xpose.msra.mxu0 0.0
        %542 = vmatpush.xpose.msra.mxu0 0.0
        %543 = vmatpush.xpose.msra.mxu0 0.0
        %544 = vmatpush.xpose.msra.mxu0 0.0
        %545 = vmatpush.xpose.msra.mxu0 0.0
        %546 = vmatpush.xpose.msra.mxu0 %v530
        %547 = vmatpush.xpose.msra.mxu0 %v528
        %548 = vmatmul.f32.gmra.mxu0 %v526
        %v549 = vpop.f32.mrf.mxu0
        %v550 = vadd.f32 0.0, %v549
        %551 = vdwg.mxu0
        %v552 = vsel %vm471, %v550, -inf
        %553 = vmax.xlane.f32.xlu0 %v552
        %v554 = vpop.xlane.xlu0 %553
        %v555 = vsub.f32 %v550, %v554
        %v556 = vmul.f32 %v555, 1.442695
        %v557 = vpow.pop %v556
        %v558 = vsel %vm471, %v557, 0.0
        %559 = vadd.xlane.f32.xlu0 %v558
        %v560 = vpop.xlane.xlu0 %559
        %v561 = vrcp.pop %v560
        %v562 = vmul.f32 %v560, %v561
        %v563 = vsub.f32 1.0, %v562
        %v564 = vmul.f32 %v561, %v563
        %v565 = vadd.f32 %v561, %v564
        %vm566 = vweird.f32 %v560
        %vm567 = vweird.f32 %v561
        %vm568 = vmor %vm566, %vm567
        %v569 = vsel %vm568, %v561, %v565
        %v570 = vand.u32 2147483647, %v560
        %vm571 = vcmp.eq.f32.partialorder %v570, 8.507059e+37
        %v572 = vand.u32 %v560, 2147483648
        %v573 = vor.u32 1.1754944e-38, %v572
        %v574 = vsel %vm571, %v573, %v569
        %v575 = vmul.f32 %v557, %v574
        %578 = vrot.lane.b32.xlu0 %v436, 120
        %v579 = vpop.permute.xlu0 %578
        %580 = vrot.lane.b32.xlu0 %v439, 120
        %v581 = vpop.permute.xlu0 %580
        %v585 = vsel %vm471, %v575, 0
        %587 = vmatpush.msra.mxu0 0.0
        %588 = vmatpush.msra.mxu0 0.0
        %589 = vmatpush.msra.mxu0 0.0
        %590 = vmatpush.msra.mxu0 0.0
        %591 = vmatpush.msra.mxu0 0.0
        %592 = vmatpush.msra.mxu0 0.0
        %593 = vmatpush.msra.mxu0 0.0
        %594 = vmatpush.msra.mxu0 0.0
        %595 = vmatpush.msra.mxu0 0.0
        %596 = vmatpush.msra.mxu0 0.0
        %597 = vmatpush.msra.mxu0 0.0
        %598 = vmatpush.msra.mxu0 0.0
        %599 = vmatpush.msra.mxu0 0.0
        %600 = vmatpush.msra.mxu0 0.0
        %601 = vmatpush.msra.mxu0 %v581
        %602 = vmatpush.msra.mxu0 %v579
        %603 = vmatmul.f32.gmra.mxu0 %v585
        %v604 = vpop.f32.mrf.mxu0
        %v605 = vadd.f32 0.0, %v604
        %606 = vdwg.mxu0
        %608 = vrot.lane.b32.xlu0 %v605, 8
        %v609 = vpop.permute.xlu0 %608
        %vm611 = vcmask 130112
        %612 = vst.msk [vmem:[#allocation2] sm:$0xff] %vm611, %v609
        %613 = vrot.lane.b32.xlu0 %v353, 112
        %v614 = vpop.permute.xlu0 %613
        %615 = vrot.lane.b32.xlu0 %v393, 112
        %v616 = vpop.permute.xlu0 %615
        %617 = vrot.lane.b32.xlu0 %v396, 112
        %v618 = vpop.permute.xlu0 %617
        %v619 = vsel %vm441, %v614, 0
        %v621 = vsel %vm441, %v616, 0
        %v623 = vsel %vm441, %v618, 0
        %625 = vmatpush.xpose.msra.mxu0 0.0
        %626 = vmatpush.xpose.msra.mxu0 0.0
        %627 = vmatpush.xpose.msra.mxu0 0.0
        %628 = vmatpush.xpose.msra.mxu0 0.0
        %629 = vmatpush.xpose.msra.mxu0 0.0
        %630 = vmatpush.xpose.msra.mxu0 0.0
        %631 = vmatpush.xpose.msra.mxu0 0.0
        %632 = vmatpush.xpose.msra.mxu0 0.0
        %633 = vmatpush.xpose.msra.mxu0 0.0
        %634 = vmatpush.xpose.msra.mxu0 0.0
        %635 = vmatpush.xpose.msra.mxu0 0.0
        %636 = vmatpush.xpose.msra.mxu0 0.0
        %637 = vmatpush.xpose.msra.mxu0 0.0
        %638 = vmatpush.xpose.msra.mxu0 0.0
        %639 = vmatpush.xpose.msra.mxu0 %v623
        %640 = vmatpush.xpose.msra.mxu0 %v621
        %641 = vmatmul.f32.gmra.mxu0 %v619
        %v642 = vpop.f32.mrf.mxu0
        %v643 = vadd.f32 0.0, %v642
        %644 = vdwg.mxu0
        %v645 = vsel %vm471, %v643, -inf
        %646 = vmax.xlane.f32.xlu0 %v645
        %v647 = vpop.xlane.xlu0 %646
        %v648 = vsub.f32 %v643, %v647
        %v649 = vmul.f32 %v648, 1.442695
        %v650 = vpow.pop %v649
        %v651 = vsel %vm471, %v650, 0.0
        %652 = vadd.xlane.f32.xlu0 %v651
        %v653 = vpop.xlane.xlu0 %652
        %v654 = vrcp.pop %v653
        %v655 = vmul.f32 %v653, %v654
        %v656 = vsub.f32 1.0, %v655
        %v657 = vmul.f32 %v654, %v656
        %v658 = vadd.f32 %v654, %v657
        %vm659 = vweird.f32 %v653
        %vm660 = vweird.f32 %v654
        %vm661 = vmor %vm659, %vm660
        %v662 = vsel %vm661, %v654, %v658
        %v663 = vand.u32 2147483647, %v653
        %vm664 = vcmp.eq.f32.partialorder %v663, 8.507059e+37
        %v665 = vand.u32 %v653, 2147483648
        %v666 = vor.u32 1.1754944e-38, %v665
        %v667 = vsel %vm664, %v666, %v662
        %v668 = vmul.f32 %v650, %v667
        %669 = vrot.lane.b32.xlu0 %v436, 112
        %v670 = vpop.permute.xlu0 %669
        %671 = vrot.lane.b32.xlu0 %v439, 112
        %v672 = vpop.permute.xlu0 %671
        %v676 = vsel %vm471, %v668, 0
        %678 = vmatpush.msra.mxu0 0.0
        %679 = vmatpush.msra.mxu0 0.0
        %680 = vmatpush.msra.mxu0 0.0
        %681 = vmatpush.msra.mxu0 0.0
        %682 = vmatpush.msra.mxu0 0.0
        %683 = vmatpush.msra.mxu0 0.0
        %684 = vmatpush.msra.mxu0 0.0
        %685 = vmatpush.msra.mxu0 0.0
        %686 = vmatpush.msra.mxu0 0.0
        %687 = vmatpush.msra.mxu0 0.0
        %688 = vmatpush.msra.mxu0 0.0
        %689 = vmatpush.msra.mxu0 0.0
        %690 = vmatpush.msra.mxu0 0.0
        %691 = vmatpush.msra.mxu0 0.0
        %692 = vmatpush.msra.mxu0 %v672
        %693 = vmatpush.msra.mxu0 %v670
        %694 = vmatmul.f32.gmra.mxu0 %v676
        %v695 = vpop.f32.mrf.mxu0
        %v696 = vadd.f32 0.0, %v695
        %697 = vdwg.mxu0
        %699 = vrot.lane.b32.xlu0 %v696, 16
        %v700 = vpop.permute.xlu0 %699
        %vm702 = vcmask 195712
        %703 = vst.msk [vmem:[#allocation2] sm:$0xff] %vm702, %v700
        %704 = vrot.lane.b32.xlu0 %v353, 104
        %v705 = vpop.permute.xlu0 %704
        %706 = vrot.lane.b32.xlu0 %v393, 104
        %v707 = vpop.permute.xlu0 %706
        %708 = vrot.lane.b32.xlu0 %v396, 104
        %v709 = vpop.permute.xlu0 %708
        %v710 = vsel %vm441, %v705, 0
        %v712 = vsel %vm441, %v707, 0
        %v714 = vsel %vm441, %v709, 0
        %716 = vmatpush.xpose.msra.mxu0 0.0
        %717 = vmatpush.xpose.msra.mxu0 0.0
        %718 = vmatpush.xpose.msra.mxu0 0.0
        %719 = vmatpush.xpose.msra.mxu0 0.0
        %720 = vmatpush.xpose.msra.mxu0 0.0
        %721 = vmatpush.xpose.msra.mxu0 0.0
        %722 = vmatpush.xpose.msra.mxu0 0.0
        %723 = vmatpush.xpose.msra.mxu0 0.0
        %724 = vmatpush.xpose.msra.mxu0 0.0
        %725 = vmatpush.xpose.msra.mxu0 0.0
        %726 = vmatpush.xpose.msra.mxu0 0.0
        %727 = vmatpush.xpose.msra.mxu0 0.0
        %728 = vmatpush.xpose.msra.mxu0 0.0
        %729 = vmatpush.xpose.msra.mxu0 0.0
        %730 = vmatpush.xpose.msra.mxu0 %v714
        %731 = vmatpush.xpose.msra.mxu0 %v712
        %732 = vmatmul.f32.gmra.mxu0 %v710
        %v733 = vpop.f32.mrf.mxu0
        %v734 = vadd.f32 0.0, %v733
        %735 = vdwg.mxu0
        %v736 = vsel %vm471, %v734, -inf
        %737 = vmax.xlane.f32.xlu0 %v736
        %v738 = vpop.xlane.xlu0 %737
        %v739 = vsub.f32 %v734, %v738
        %v740 = vmul.f32 %v739, 1.442695
        %v741 = vpow.pop %v740
        %v742 = vsel %vm471, %v741, 0.0
        %743 = vadd.xlane.f32.xlu0 %v742
        %v744 = vpop.xlane.xlu0 %743
        %v745 = vrcp.pop %v744
        %v746 = vmul.f32 %v744, %v745
        %v747 = vsub.f32 1.0, %v746
        %v748 = vmul.f32 %v745, %v747
        %v749 = vadd.f32 %v745, %v748
        %vm750 = vweird.f32 %v744
        %vm751 = vweird.f32 %v745
        %vm752 = vmor %vm750, %vm751
        %v753 = vsel %vm752, %v745, %v749
        %v754 = vand.u32 2147483647, %v744
        %vm755 = vcmp.eq.f32.partialorder %v754, 8.507059e+37
        %v756 = vand.u32 %v744, 2147483648
        %v757 = vor.u32 1.1754944e-38, %v756
        %v758 = vsel %vm755, %v757, %v753
        %v759 = vmul.f32 %v741, %v758
        %760 = vrot.lane.b32.xlu0 %v436, 104
        %v761 = vpop.permute.xlu0 %760
        %762 = vrot.lane.b32.xlu0 %v439, 104
        %v763 = vpop.permute.xlu0 %762
        %v767 = vsel %vm471, %v759, 0
        %769 = vmatpush.msra.mxu0 0.0
        %770 = vmatpush.msra.mxu0 0.0
        %771 = vmatpush.msra.mxu0 0.0
        %772 = vmatpush.msra.mxu0 0.0
        %773 = vmatpush.msra.mxu0 0.0
        %774 = vmatpush.msra.mxu0 0.0
        %775 = vmatpush.msra.mxu0 0.0
        %776 = vmatpush.msra.mxu0 0.0
        %777 = vmatpush.msra.mxu0 0.0
        %778 = vmatpush.msra.mxu0 0.0
        %779 = vmatpush.msra.mxu0 0.0
        %780 = vmatpush.msra.mxu0 0.0
        %781 = vmatpush.msra.mxu0 0.0
        %782 = vmatpush.msra.mxu0 0.0
        %783 = vmatpush.msra.mxu0 %v763
        %784 = vmatpush.msra.mxu0 %v761
        %785 = vmatmul.f32.gmra.mxu0 %v767
        %v786 = vpop.f32.mrf.mxu0
        %v787 = vadd.f32 0.0, %v786
        %788 = vdwg.mxu0
        %790 = vrot.lane.b32.xlu0 %v787, 24
        %v791 = vpop.permute.xlu0 %790
        %vm793 = vcmask 261312
        %794 = vst.msk [vmem:[#allocation2] sm:$0xff] %vm793, %v791
        %795 = vrot.lane.b32.xlu0 %v353, 96
        %v796 = vpop.permute.xlu0 %795
        %797 = vrot.lane.b32.xlu0 %v393, 96
        %v798 = vpop.permute.xlu0 %797
        %799 = vrot.lane.b32.xlu0 %v396, 96
        %v800 = vpop.permute.xlu0 %799
        %v801 = vsel %vm441, %v796, 0
        %v803 = vsel %vm441, %v798, 0
        %v805 = vsel %vm441, %v800, 0
        %807 = vmatpush.xpose.msra.mxu0 0.0
        %808 = vmatpush.xpose.msra.mxu0 0.0
        %809 = vmatpush.xpose.msra.mxu0 0.0
        %810 = vmatpush.xpose.msra.mxu0 0.0
        %811 = vmatpush.xpose.msra.mxu0 0.0
        %812 = vmatpush.xpose.msra.mxu0 0.0
        %813 = vmatpush.xpose.msra.mxu0 0.0
        %814 = vmatpush.xpose.msra.mxu0 0.0
        %815 = vmatpush.xpose.msra.mxu0 0.0
        %816 = vmatpush.xpose.msra.mxu0 0.0
        %817 = vmatpush.xpose.msra.mxu0 0.0
        %818 = vmatpush.xpose.msra.mxu0 0.0
        %819 = vmatpush.xpose.msra.mxu0 0.0
        %820 = vmatpush.xpose.msra.mxu0 0.0
        %821 = vmatpush.xpose.msra.mxu0 %v805
        %822 = vmatpush.xpose.msra.mxu0 %v803
        %823 = vmatmul.f32.gmra.mxu0 %v801
        %v824 = vpop.f32.mrf.mxu0
        %v825 = vadd.f32 0.0, %v824
        %826 = vdwg.mxu0
        %v827 = vsel %vm471, %v825, -inf
        %828 = vmax.xlane.f32.xlu0 %v827
        %v829 = vpop.xlane.xlu0 %828
        %v830 = vsub.f32 %v825, %v829
        %v831 = vmul.f32 %v830, 1.442695
        %v832 = vpow.pop %v831
        %v833 = vsel %vm471, %v832, 0.0
        %834 = vadd.xlane.f32.xlu0 %v833
        %v835 = vpop.xlane.xlu0 %834
        %v836 = vrcp.pop %v835
        %v837 = vmul.f32 %v835, %v836
        %v838 = vsub.f32 1.0, %v837
        %v839 = vmul.f32 %v836, %v838
        %v840 = vadd.f32 %v836, %v839
        %vm841 = vweird.f32 %v835
        %vm842 = vweird.f32 %v836
        %vm843 = vmor %vm841, %vm842
        %v844 = vsel %vm843, %v836, %v840
        %v845 = vand.u32 2147483647, %v835
        %vm846 = vcmp.eq.f32.partialorder %v845, 8.507059e+37
        %v847 = vand.u32 %v835, 2147483648
        %v848 = vor.u32 1.1754944e-38, %v847
        %v849 = vsel %vm846, %v848, %v844
        %v850 = vmul.f32 %v832, %v849
        %851 = vrot.lane.b32.xlu0 %v436, 96
        %v852 = vpop.permute.xlu0 %851
        %853 = vrot.lane.b32.xlu0 %v439, 96
        %v854 = vpop.permute.xlu0 %853
        %v858 = vsel %vm471, %v850, 0
        %860 = vmatpush.msra.mxu0 0.0
        %861 = vmatpush.msra.mxu0 0.0
        %862 = vmatpush.msra.mxu0 0.0
        %863 = vmatpush.msra.mxu0 0.0
        %864 = vmatpush.msra.mxu0 0.0
        %865 = vmatpush.msra.mxu0 0.0
        %866 = vmatpush.msra.mxu0 0.0
        %867 = vmatpush.msra.mxu0 0.0
        %868 = vmatpush.msra.mxu0 0.0
        %869 = vmatpush.msra.mxu0 0.0
        %870 = vmatpush.msra.mxu0 0.0
        %871 = vmatpush.msra.mxu0 0.0
        %872 = vmatpush.msra.mxu0 0.0
        %873 = vmatpush.msra.mxu0 0.0
        %874 = vmatpush.msra.mxu0 %v854
        %875 = vmatpush.msra.mxu0 %v852
        %876 = vmatmul.f32.gmra.mxu0 %v858
        %v877 = vpop.f32.mrf.mxu0
        %v878 = vadd.f32 0.0, %v877
        %879 = vdwg.mxu0
        %881 = vrot.lane.b32.xlu0 %v878, 32
        %v882 = vpop.permute.xlu0 %881
        %vm884 = vcmask 326912
        %885 = vst.msk [vmem:[#allocation2] sm:$0xff] %vm884, %v882
        %886 = vrot.lane.b32.xlu0 %v353, 88
        %v887 = vpop.permute.xlu0 %886
        %888 = vrot.lane.b32.xlu0 %v393, 88
        %v889 = vpop.permute.xlu0 %888
        %890 = vrot.lane.b32.xlu0 %v396, 88
        %v891 = vpop.permute.xlu0 %890
        %v892 = vsel %vm441, %v887, 0
        %v894 = vsel %vm441, %v889, 0
        %v896 = vsel %vm441, %v891, 0
        %898 = vmatpush.xpose.msra.mxu0 0.0
        %899 = vmatpush.xpose.msra.mxu0 0.0
        %900 = vmatpush.xpose.msra.mxu0 0.0
        %901 = vmatpush.xpose.msra.mxu0 0.0
        %902 = vmatpush.xpose.msra.mxu0 0.0
        %903 = vmatpush.xpose.msra.mxu0 0.0
        %904 = vmatpush.xpose.msra.mxu0 0.0
        %905 = vmatpush.xpose.msra.mxu0 0.0
        %906 = vmatpush.xpose.msra.mxu0 0.0
        %907 = vmatpush.xpose.msra.mxu0 0.0
        %908 = vmatpush.xpose.msra.mxu0 0.0
        %909 = vmatpush.xpose.msra.mxu0 0.0
        %910 = vmatpush.xpose.msra.mxu0 0.0
        %911 = vmatpush.xpose.msra.mxu0 0.0
        %912 = vmatpush.xpose.msra.mxu0 %v896
        %913 = vmatpush.xpose.msra.mxu0 %v894
        %914 = vmatmul.f32.gmra.mxu0 %v892
        %v915 = vpop.f32.mrf.mxu0
        %v916 = vadd.f32 0.0, %v915
        %917 = vdwg.mxu0
        %v918 = vsel %vm471, %v916, -inf
        %919 = vmax.xlane.f32.xlu0 %v918
        %v920 = vpop.xlane.xlu0 %919
        %v921 = vsub.f32 %v916, %v920
        %v922 = vmul.f32 %v921, 1.442695
        %v923 = vpow.pop %v922
        %v924 = vsel %vm471, %v923, 0.0
        %925 = vadd.xlane.f32.xlu0 %v924
        %v926 = vpop.xlane.xlu0 %925
        %v927 = vrcp.pop %v926
        %v928 = vmul.f32 %v926, %v927
        %v929 = vsub.f32 1.0, %v928
        %v930 = vmul.f32 %v927, %v929
        %v931 = vadd.f32 %v927, %v930
        %vm932 = vweird.f32 %v926
        %vm933 = vweird.f32 %v927
        %vm934 = vmor %vm932, %vm933
        %v935 = vsel %vm934, %v927, %v931
        %v936 = vand.u32 2147483647, %v926
        %vm937 = vcmp.eq.f32.partialorder %v936, 8.507059e+37
        %v938 = vand.u32 %v926, 2147483648
        %v939 = vor.u32 1.1754944e-38, %v938
        %v940 = vsel %vm937, %v939, %v935
        %v941 = vmul.f32 %v923, %v940
        %942 = vrot.lane.b32.xlu0 %v436, 88
        %v943 = vpop.permute.xlu0 %942
        %944 = vrot.lane.b32.xlu0 %v439, 88
        %v945 = vpop.permute.xlu0 %944
        %v949 = vsel %vm471, %v941, 0
        %951 = vmatpush.msra.mxu0 0.0
        %952 = vmatpush.msra.mxu0 0.0
        %953 = vmatpush.msra.mxu0 0.0
        %954 = vmatpush.msra.mxu0 0.0
        %955 = vmatpush.msra.mxu0 0.0
        %956 = vmatpush.msra.mxu0 0.0
        %957 = vmatpush.msra.mxu0 0.0
        %958 = vmatpush.msra.mxu0 0.0
        %959 = vmatpush.msra.mxu0 0.0
        %960 = vmatpush.msra.mxu0 0.0
        %961 = vmatpush.msra.mxu0 0.0
        %962 = vmatpush.msra.mxu0 0.0
        %963 = vmatpush.msra.mxu0 0.0
        %964 = vmatpush.msra.mxu0 0.0
        %965 = vmatpush.msra.mxu0 %v945
        %966 = vmatpush.msra.mxu0 %v943
        %967 = vmatmul.f32.gmra.mxu0 %v949
        %v968 = vpop.f32.mrf.mxu0
        %v969 = vadd.f32 0.0, %v968
        %970 = vdwg.mxu0
        %972 = vrot.lane.b32.xlu0 %v969, 40
        %v973 = vpop.permute.xlu0 %972
        %vm975 = vcmask 392512
        %976 = vst.msk [vmem:[#allocation2] sm:$0xff] %vm975, %v973
        %977 = vrot.lane.b32.xlu0 %v353, 80
        %v978 = vpop.permute.xlu0 %977
        %979 = vrot.lane.b32.xlu0 %v393, 80
        %v980 = vpop.permute.xlu0 %979
        %981 = vrot.lane.b32.xlu0 %v396, 80
        %v982 = vpop.permute.xlu0 %981
        %v983 = vsel %vm441, %v978, 0
        %v985 = vsel %vm441, %v980, 0
        %v987 = vsel %vm441, %v982, 0
        %989 = vmatpush.xpose.msra.mxu0 0.0
        %990 = vmatpush.xpose.msra.mxu0 0.0
        %991 = vmatpush.xpose.msra.mxu0 0.0
        %992 = vmatpush.xpose.msra.mxu0 0.0
        %993 = vmatpush.xpose.msra.mxu0 0.0
        %994 = vmatpush.xpose.msra.mxu0 0.0
        %995 = vmatpush.xpose.msra.mxu0 0.0
        %996 = vmatpush.xpose.msra.mxu0 0.0
        %997 = vmatpush.xpose.msra.mxu0 0.0
        %998 = vmatpush.xpose.msra.mxu0 0.0
        %999 = vmatpush.xpose.msra.mxu0 0.0
        %1000 = vmatpush.xpose.msra.mxu0 0.0
        %1001 = vmatpush.xpose.msra.mxu0 0.0
        %1002 = vmatpush.xpose.msra.mxu0 0.0
        %1003 = vmatpush.xpose.msra.mxu0 %v987
        %1004 = vmatpush.xpose.msra.mxu0 %v985
        %1005 = vmatmul.f32.gmra.mxu0 %v983
        %v1006 = vpop.f32.mrf.mxu0
        %v1007 = vadd.f32 0.0, %v1006
        %1008 = vdwg.mxu0
        %v1009 = vsel %vm471, %v1007, -inf
        %1010 = vmax.xlane.f32.xlu0 %v1009
        %v1011 = vpop.xlane.xlu0 %1010
        %v1012 = vsub.f32 %v1007, %v1011
        %v1013 = vmul.f32 %v1012, 1.442695
        %v1014 = vpow.pop %v1013
        %v1015 = vsel %vm471, %v1014, 0.0
        %1016 = vadd.xlane.f32.xlu0 %v1015
        %v1017 = vpop.xlane.xlu0 %1016
        %v1018 = vrcp.pop %v1017
        %v1019 = vmul.f32 %v1017, %v1018
        %v1020 = vsub.f32 1.0, %v1019
        %v1021 = vmul.f32 %v1018, %v1020
        %v1022 = vadd.f32 %v1018, %v1021
        %vm1023 = vweird.f32 %v1017
        %vm1024 = vweird.f32 %v1018
        %vm1025 = vmor %vm1023, %vm1024
        %v1026 = vsel %vm1025, %v1018, %v1022
        %v1027 = vand.u32 2147483647, %v1017
        %vm1028 = vcmp.eq.f32.partialorder %v1027, 8.507059e+37
        %v1029 = vand.u32 %v1017, 2147483648
        %v1030 = vor.u32 1.1754944e-38, %v1029
        %v1031 = vsel %vm1028, %v1030, %v1026
        %v1032 = vmul.f32 %v1014, %v1031
        %1033 = vrot.lane.b32.xlu0 %v436, 80
        %v1034 = vpop.permute.xlu0 %1033
        %1035 = vrot.lane.b32.xlu0 %v439, 80
        %v1036 = vpop.permute.xlu0 %1035
        %v1040 = vsel %vm471, %v1032, 0
        %1042 = vmatpush.msra.mxu0 0.0
        %1043 = vmatpush.msra.mxu0 0.0
        %1044 = vmatpush.msra.mxu0 0.0
        %1045 = vmatpush.msra.mxu0 0.0
        %1046 = vmatpush.msra.mxu0 0.0
        %1047 = vmatpush.msra.mxu0 0.0
        %1048 = vmatpush.msra.mxu0 0.0
        %1049 = vmatpush.msra.mxu0 0.0
        %1050 = vmatpush.msra.mxu0 0.0
        %1051 = vmatpush.msra.mxu0 0.0
        %1052 = vmatpush.msra.mxu0 0.0
        %1053 = vmatpush.msra.mxu0 0.0
        %1054 = vmatpush.msra.mxu0 0.0
        %1055 = vmatpush.msra.mxu0 0.0
        %1056 = vmatpush.msra.mxu0 %v1036
        %1057 = vmatpush.msra.mxu0 %v1034
        %1058 = vmatmul.f32.gmra.mxu0 %v1040
        %v1059 = vpop.f32.mrf.mxu0
        %v1060 = vadd.f32 0.0, %v1059
        %1061 = vdwg.mxu0
        %1063 = vrot.lane.b32.xlu0 %v1060, 48
        %v1064 = vpop.permute.xlu0 %1063
        %vm1066 = vcmask 458112
        %1067 = vst.msk [vmem:[#allocation2] sm:$0xff] %vm1066, %v1064
        %1068 = vrot.lane.b32.xlu0 %v353, 72
        %v1069 = vpop.permute.xlu0 %1068
        %1070 = vrot.lane.b32.xlu0 %v393, 72
        %v1071 = vpop.permute.xlu0 %1070
        %1072 = vrot.lane.b32.xlu0 %v396, 72
        %v1073 = vpop.permute.xlu0 %1072
        %v1074 = vsel %vm441, %v1069, 0
        %v1076 = vsel %vm441, %v1071, 0
        %v1078 = vsel %vm441, %v1073, 0
        %1080 = vmatpush.xpose.msra.mxu0 0.0
        %1081 = vmatpush.xpose.msra.mxu0 0.0
        %1082 = vmatpush.xpose.msra.mxu0 0.0
        %1083 = vmatpush.xpose.msra.mxu0 0.0
        %1084 = vmatpush.xpose.msra.mxu0 0.0
        %1085 = vmatpush.xpose.msra.mxu0 0.0
        %1086 = vmatpush.xpose.msra.mxu0 0.0
        %1087 = vmatpush.xpose.msra.mxu0 0.0
        %1088 = vmatpush.xpose.msra.mxu0 0.0
        %1089 = vmatpush.xpose.msra.mxu0 0.0
        %1090 = vmatpush.xpose.msra.mxu0 0.0
        %1091 = vmatpush.xpose.msra.mxu0 0.0
        %1092 = vmatpush.xpose.msra.mxu0 0.0
        %1093 = vmatpush.xpose.msra.mxu0 0.0
        %1094 = vmatpush.xpose.msra.mxu0 %v1078
        %1095 = vmatpush.xpose.msra.mxu0 %v1076
        %1096 = vmatmul.f32.gmra.mxu0 %v1074
        %v1097 = vpop.f32.mrf.mxu0
        %v1098 = vadd.f32 0.0, %v1097
        %1099 = vdwg.mxu0
        %v1100 = vsel %vm471, %v1098, -inf
        %1101 = vmax.xlane.f32.xlu0 %v1100
        %v1102 = vpop.xlane.xlu0 %1101
        %v1103 = vsub.f32 %v1098, %v1102
        %v1104 = vmul.f32 %v1103, 1.442695
        %v1105 = vpow.pop %v1104
        %v1106 = vsel %vm471, %v1105, 0.0
        %1107 = vadd.xlane.f32.xlu0 %v1106
        %v1108 = vpop.xlane.xlu0 %1107
        %v1109 = vrcp.pop %v1108
        %v1110 = vmul.f32 %v1108, %v1109
        %v1111 = vsub.f32 1.0, %v1110
        %v1112 = vmul.f32 %v1109, %v1111
        %v1113 = vadd.f32 %v1109, %v1112
        %vm1114 = vweird.f32 %v1108
        %vm1115 = vweird.f32 %v1109
        %vm1116 = vmor %vm1114, %vm1115
        %v1117 = vsel %vm1116, %v1109, %v1113
        %v1118 = vand.u32 2147483647, %v1108
        %vm1119 = vcmp.eq.f32.partialorder %v1118, 8.507059e+37
        %v1120 = vand.u32 %v1108, 2147483648
        %v1121 = vor.u32 1.1754944e-38, %v1120
        %v1122 = vsel %vm1119, %v1121, %v1117
        %v1123 = vmul.f32 %v1105, %v1122
        %1124 = vrot.lane.b32.xlu0 %v436, 72
        %v1125 = vpop.permute.xlu0 %1124
        %1126 = vrot.lane.b32.xlu0 %v439, 72
        %v1127 = vpop.permute.xlu0 %1126
        %v1131 = vsel %vm471, %v1123, 0
        %1133 = vmatpush.msra.mxu0 0.0
        %1134 = vmatpush.msra.mxu0 0.0
        %1135 = vmatpush.msra.mxu0 0.0
        %1136 = vmatpush.msra.mxu0 0.0
        %1137 = vmatpush.msra.mxu0 0.0
        %1138 = vmatpush.msra.mxu0 0.0
        %1139 = vmatpush.msra.mxu0 0.0
        %1140 = vmatpush.msra.mxu0 0.0
        %1141 = vmatpush.msra.mxu0 0.0
        %1142 = vmatpush.msra.mxu0 0.0
        %1143 = vmatpush.msra.mxu0 0.0
        %1144 = vmatpush.msra.mxu0 0.0
        %1145 = vmatpush.msra.mxu0 0.0
        %1146 = vmatpush.msra.mxu0 0.0
        %1147 = vmatpush.msra.mxu0 %v1127
        %1148 = vmatpush.msra.mxu0 %v1125
        %1149 = vmatmul.f32.gmra.mxu0 %v1131
        %v1150 = vpop.f32.mrf.mxu0
        %v1151 = vadd.f32 0.0, %v1150
        %1152 = vdwg.mxu0
        %1154 = vrot.lane.b32.xlu0 %v1151, 56
        %v1155 = vpop.permute.xlu0 %1154
        %vm1157 = vcmask 523712
        %1158 = vst.msk [vmem:[#allocation2] sm:$0xff] %vm1157, %v1155
        %v1159 = vld [vmem:[#allocation2] sm:$0xff]
        %v1160 = vld [vmem:[%s5] sm:$0xff]
        %v1161 = vld [vmem:[%s5 + $0x8] sm:$0xff]
        %v1162 = vld [vmem:[%s5 + $0x10] sm:$0xff]
        %v1163 = vld [vmem:[%s5 + $0x18] sm:$0xff]
        %v1164 = vld [vmem:[%s5 + $0x20] sm:$0xff]
        %v1165 = vld [vmem:[%s5 + $0x28] sm:$0xff]
        %v1166 = vld [vmem:[%s5 + $0x30] sm:$0xff]
        %v1167 = vld [vmem:[%s5 + $0x38] sm:$0xff]
        %v1168 = vld [vmem:[%s6] sm:$0x1]
        %v1170 = vperm.slane %v1168, 0
        %v1173 = vsel %vm331, %v1159, 0
        %1175 = vmatpush.msra.mxu0 0.0
        %1176 = vmatpush.msra.mxu0 0.0
        %1177 = vmatpush.msra.mxu0 0.0
        %1178 = vmatpush.msra.mxu0 0.0
        %1179 = vmatpush.msra.mxu0 0.0
        %1180 = vmatpush.msra.mxu0 0.0
        %1181 = vmatpush.msra.mxu0 0.0
        %1182 = vmatpush.msra.mxu0 0.0
        %1183 = vmatpush.msra.mxu0 %v1167
        %1184 = vmatpush.msra.mxu0 %v1166
        %1185 = vmatpush.msra.mxu0 %v1165
        %1186 = vmatpush.msra.mxu0 %v1164
        %1187 = vmatpush.msra.mxu0 %v1163
        %1188 = vmatpush.msra.mxu0 %v1162
        %1189 = vmatpush.msra.mxu0 %v1161
        %1190 = vmatpush.msra.mxu0 %v1160
        %1191 = vmatmul.f32.gmra.mxu0 %v1173
        %v1192 = vpop.f32.mrf.mxu0
        %v1193 = vadd.f32 %v1170, %v1192
        %1194 = vdwg.mxu0
        %1195 = vst.msk [vmem:[%s299] sm:$0xff] %vm331, %v1193
        %s1196 = sand.u32 %s191, 1
        %s1197 = scalar_lea.sflag [#allocation4], %s1196
        %s1198 = sand.u32 %s191, 1
        %s1199 = smul.addr %s1198, 8
        %s1200 = scalar_lea.vmem [#allocation3], %s1199
        // Predicated region
        $region49: #{_lambda_.1} parent=47 // pred_check
          %p1201 = pneg %p201
        $region50: #{_lambda_.1} parent=47 // pred_check_branch
          %1203 = sbr.rel (%p1201) target = $region52
        $region51: #{_lambda_.1} parent=47 // pred_region
          %1205 = vsyncadd %s1197, 0
          %s1206 = smul.addr %s21, 8
          %s1207 = scalar_lea.hbm %s7, %s1206
          %s1209 = sshll.u32 %s1200, 4
          %s1210 = int_to_ptr.vmem [resolvable:$true] %s1209
          %s1211 = sshll.u32 %s1207, 4
          %s1212 = int_to_ptr.hbm [resolvable:$true] %s1211
          %1214 = dma.vmem_to_hbm [thread:$0]  %s1210, 128, %s1212, %s1197
        $region52: #{_lambda_.1} parent=47 // pred_fallthru
          _
      $region48: #{_lambda_.1} parent=5 // pred_fallthru
        _
      %p1215 = scmp.le.s32.totalorder 2, %s16
      // Predicated region
      $region53: #{_lambda_.1} parent=5 // pred_check
        %p1216 = pneg %p1215
      $region54: #{_lambda_.1} parent=5 // pred_check_branch
        %1218 = sbr.rel (%p1216) target = $region56
      $region55: #{_lambda_.1} parent=5 // pred_region
        %s1219 = ssub.s32 %s16, 2
        // Predicated region
        $region57: #{_lambda_.1} parent=55 // pred_check
          %p1220 = pneg %p207
        $region58: #{_lambda_.1} parent=55 // pred_check_branch
          %1222 = sbr.rel (%p1220) target = $region60
        $region59: #{_lambda_.1} parent=55 // pred_region
          %s1223 = sand.u32 %s192, 1
          %s1224 = scalar_lea.sflag [#allocation4], %s1223
          %s1225 = sand.u32 %s192, 1
          %s1226 = smul.addr %s1225, 8
          %s1227 = scalar_lea.vmem [#allocation3], %s1226
          %1229 = dma.done %s1224, 128
        $region60: #{_lambda_.1} parent=55 // pred_fallthru
          _
      $region56: #{_lambda_.1} parent=5 // pred_fallthru
        _
    $region6: #{_lambda_.1} parent=1 // loop_footer
      %s20 = sadd.s32 1, %s16
    $region7: #{_lambda_.1} parent=1 // loop_footer_branch
      %15 = sbr.rel target = $region3
    $region8: #{_lambda_.1} parent=1 // loop_exit
      _
    %1230 = vsyncpa [#allocation4], 1
    %s1231 = scalar_lea.sflag [#allocation4], 1
    %1232 = vsyncpa %s1231, 1

</llo_original>
